<compile_context>
chip_gen: v6e
topology: v6e:2x2x1
jax: 0.10.0
libtpu: 0.0.40
codegen_flags: <defaults>
</compile_context>

<pallas_src>
import functools

import jax
import jax.numpy as jnp
from jax import lax
from jax.experimental import pallas as pl
from jax.experimental.pallas import tpu as pltpu


def _round_up(v, m):
    return ((v + m - 1) // m) * m


def _dir_block(d, c, num_chunks):
    """Chunk block index: forward walk for direction 0, reverse for direction 1.

    Pure integer arithmetic (d in {0,1}) so it is safe both in BlockSpec
    index_maps (scalar core) and inside the kernel body.
    """
    return (1 - d) * c + d * (num_chunks - 1 - c)


def _lstm_kernel(x_ref, wih_ref, whh_ref, b_ref, out_ref,
                 xw_scr, h_scr, c_scr, *,
                 seq_len, time_chunk, num_chunks, unroll):
    """One grid step = one (direction, time-chunk).

    x_ref   : (Tc*Bp, D)     this chunk's inputs (matmul dtype, maybe bf16)
    wih_ref : (D, 4Hp)       this direction's input weights (pre-transposed)
    whh_ref : (Hp, 4Hp)      this direction's recurrent weights (pre-transposed)
    b_ref   : (1, 4Hp)       combined bias b_ih + b_hh (f32)
    out_ref : (Tc*Bp, Hp)    per-step hidden states for this chunk (f32)
    xw_scr  : (Tc*Bp, 4Hp)   chunk input projection (f32)
    h_scr   : (Bp, Hp)       persistent hidden state (f32)
    c_scr   : (Bp, Hp)       persistent cell state (f32)
    """
    Bp, Hp = h_scr.shape
    d = pl.program_id(0)
    c = pl.program_id(1)
    blk = _dir_block(d, c, num_chunks)   # the chunk block the BlockSpecs mapped

    # Reset the recurrent state at the first chunk of each direction.
    @pl.when(c == 0)
    def _():
        h_scr[...] = jnp.zeros_like(h_scr)
        c_scr[...] = jnp.zeros_like(c_scr)

    # Input projection for the whole chunk in ONE MXU matmul, bias folded in
    # once (kept off the serial recurrence path).  f32 accumulation.
    xw_scr[...] = (
        jnp.dot(x_ref[...], wih_ref[...], preferred_element_type=jnp.float32)
        + b_ref[...]
    )

    def step(s, carry):
        # Local time index within the chunk: forward 0..Tc-1, backward Tc-1..0.
        j = _dir_block(d, s, time_chunk)
        glob_t = blk * time_chunk + j
        valid = glob_t < seq_len          # padded time steps must not advance state

        row = pl.multiple_of(j * Bp, Bp)

        # gates = x_t @ Wih^T + b  (precomputed)  +  h_prev @ Whh^T
        gates = (
            xw_scr[pl.ds(row, Bp), :]
            + jnp.dot(h_scr[...].astype(whh_ref.dtype), whh_ref[...],
                      preferred_element_type=jnp.float32)
        )

        # PyTorch LSTMCell gate order: i, f, g, o.  Hp is a multiple of 128 so
        # every slice is lane-aligned.
        i_g = jax.nn.sigmoid(gates[:, 0 * Hp:1 * Hp])
        f_g = jax.nn.sigmoid(gates[:, 1 * Hp:2 * Hp])
        g_g = jnp.tanh(gates[:, 2 * Hp:3 * Hp])
        o_g = jax.nn.sigmoid(gates[:, 3 * Hp:4 * Hp])

        c_new = f_g * c_scr[...] + i_g * g_g
        h_new = o_g * jnp.tanh(c_new)

        c_upd = jnp.where(valid, c_new, c_scr[...])
        h_upd = jnp.where(valid, h_new, h_scr[...])
        c_scr[...] = c_upd
        h_scr[...] = h_upd

        # Lane-dense store into the VMEM-resident chunk block; HBM writeback is
        # one pipelined DMA per chunk.
        out_ref[pl.ds(row, Bp), :] = h_upd.astype(out_ref.dtype)
        return carry

    lax.fori_loop(0, time_chunk, step, 0, unroll=unroll)


def _auto_time_chunk(T, Bp, D, Hp, itemsize, budget_bytes=8 << 20):
    """Largest time chunk whose pipelined working set fits a conservative budget."""
    per_step = Bp * (2 * D * itemsize     # x chunk, double-buffered
                     + 2 * Hp * 4         # out chunk, double-buffered (f32)
                     + 4 * Hp * 4)        # xw scratch (f32)
    fixed = (2 * (D + Hp) * 4 * Hp * itemsize  # Wih^T + Whh^T blocks (x2 buf)
             + 2 * 4 * Hp * 4                  # bias
             + 2 * Bp * Hp * 4)                # h, c scratch
    avail = max(budget_bytes - fixed, per_step)
    return int(max(1, min(T, avail // per_step)))


def _vmem_limit_bytes(time_chunk, Bp, D, Hp, itemsize):
    est = (
        2 * time_chunk * Bp * D * itemsize          # x chunk (double-buffered)
        + 2 * time_chunk * Bp * Hp * 4              # out chunk (double-buffered)
        + 2 * (D + Hp) * 4 * Hp * itemsize          # Wih^T + Whh^T
        + 2 * 4 * Hp * 4                            # bias
        + time_chunk * Bp * 4 * Hp * 4              # xw scratch
        + 2 * Bp * Hp * 4                           # h, c scratch
    )
    return int(min(100 << 20, max(32 << 20, 2 * est)))


def rnn_batch_forward(x, params_f, params_b=None, *, time_chunk=None,
                      matmul_dtype=jnp.float32):
    """Pallas equivalent of RNN.forward in 'batch' mode (cell_type='lstm').

    x        : (T, B, D) float
    params_* : (w_ih (4H, D), w_hh (4H, H), b_ih (4H,), b_hh (4H,))
    returns  : (T, B, H) if params_b is None else (T, B, 2H)
    """
    T, B, D = x.shape
    bi_dir = params_b is not None
    num_dirs = 2 if bi_dir else 1
    H = params_f[1].shape[1]

    Hp = _round_up(max(H, 128), 128)          # lane-aligned gate width
    Bp = _round_up(max(B, 8), 8)              # sublane-aligned batch
    itemsize = jnp.dtype(matmul_dtype).itemsize

    if time_chunk is None:
        time_chunk = _auto_time_chunk(T, Bp, D, Hp, itemsize)
    time_chunk = int(max(1, min(time_chunk, T)))
    num_chunks = int(pl.cdiv(T, time_chunk))
    Tp = num_chunks * time_chunk

    def prep(p):
        w_ih, w_hh, b_ih, b_hh = (jnp.asarray(a, jnp.float32) for a in p)

        def pad_gates(w):                      # (4H, K) -> (4Hp, K), zero pad per gate
            k = w.shape[1]
            w4 = w.reshape(4, H, k)
            w4 = jnp.pad(w4, ((0, 0), (0, Hp - H), (0, 0)))
            return w4.reshape(4 * Hp, k)

        w_ih_p = pad_gates(w_ih)                               # (4Hp, D)
        w_hh_p = jnp.pad(pad_gates(w_hh), ((0, 0), (0, Hp - H)))  # (4Hp, Hp)
        b = jnp.pad((b_ih + b_hh).reshape(4, H),
                    ((0, 0), (0, Hp - H))).reshape(1, 4 * Hp)  # (1, 4Hp), f32
        return (w_ih_p.T.astype(matmul_dtype),                 # (D, 4Hp)
                w_hh_p.T.astype(matmul_dtype),                 # (Hp, 4Hp)
                b)

    preps = [prep(params_f)] + ([prep(params_b)] if bi_dir else [])
    wih_all = jnp.stack([p[0] for p in preps], axis=0)   # (nd, D, 4Hp)
    whh_all = jnp.stack([p[1] for p in preps], axis=0)   # (nd, Hp, 4Hp)
    b_all = jnp.stack([p[2] for p in preps], axis=0)     # (nd, 1, 4Hp)

    x_p = jnp.asarray(x, jnp.float32)
    x_p = jnp.pad(x_p, ((0, Tp - T), (0, Bp - B), (0, 0)))
    x2d = x_p.reshape(Tp * Bp, D).astype(matmul_dtype)

    nc = num_chunks

    def x_map(d, c):
        return (_dir_block(d, c, nc), 0)

    def w_map(d, c):
        return (d, 0, 0)

    def out_map(d, c):
        return (d, _dir_block(d, c, nc), 0)

    kernel = functools.partial(
        _lstm_kernel, seq_len=T, time_chunk=time_chunk, num_chunks=nc,
        unroll=min(time_chunk, 8))

    grid_spec = pltpu.PrefetchScalarGridSpec(
        num_scalar_prefetch=0,
        grid=(num_dirs, nc),
        in_specs=[
            pl.BlockSpec((time_chunk * Bp, D), x_map),          # x chunk (shared)
            pl.BlockSpec((None, D, 4 * Hp), w_map),             # Wih^T
            pl.BlockSpec((None, Hp, 4 * Hp), w_map),            # Whh^T
            pl.BlockSpec((None, 1, 4 * Hp), w_map),             # bias
        ],
        out_specs=pl.BlockSpec((None, time_chunk * Bp, Hp), out_map),
        scratch_shapes=[
            pltpu.VMEM((time_chunk * Bp, 4 * Hp), jnp.float32),  # chunk x-projection
            pltpu.VMEM((Bp, Hp), jnp.float32),                   # h state (persistent)
            pltpu.VMEM((Bp, Hp), jnp.float32),                   # c state (persistent)
        ],
    )

    out = pl.pallas_call(
        kernel,
        out_shape=jax.ShapeDtypeStruct((num_dirs, Tp * Bp, Hp), jnp.float32),
        grid_spec=grid_spec,
        compiler_params=pltpu.CompilerParams(
            # direction axis independent; time-chunk axis carries h/c -> sequential.
            dimension_semantics=("parallel", "arbitrary"),
            vmem_limit_bytes=_vmem_limit_bytes(time_chunk, Bp, D, Hp, itemsize),
        ),
    )(x2d, wih_all, whh_all, b_all)

    # Strip time / batch / hidden padding.
    out = out.reshape(num_dirs, Tp, Bp, Hp)[:, :T, :B, :H]
    if not bi_dir:
        return out[0]                                     # (T, B, H)
    return jnp.concatenate([out[0], out[1]], axis=-1)     # (T, B, 2H)


def init_lstm_cell_params(key, input_dim, hidden_dim):
    """Deterministic init matching nn.LSTMCell parameter shapes."""
    k1, k2, k3, k4 = jax.random.split(key, 4)
    bound = 1.0 / jnp.sqrt(hidden_dim)
    w_ih = jax.random.uniform(k1, (4 * hidden_dim, input_dim), jnp.float32, -bound, bound)
    w_hh = jax.random.uniform(k2, (4 * hidden_dim, hidden_dim), jnp.float32, -bound, bound)
    b_ih = jax.random.uniform(k3, (4 * hidden_dim,), jnp.float32, -bound, bound)
    b_hh = jax.random.uniform(k4, (4 * hidden_dim,), jnp.float32, -bound, bound)
    return (w_ih, w_hh, b_ih, b_hh)


def _lstm_reference(x, w_ih, w_hh, b_ih, b_hh):
    """Plain-JAX reference of the same LSTMCell loop."""
    T, B, D = x.shape
    H = w_hh.shape[1]
    h = jnp.zeros((B, H), jnp.float32)
    c = jnp.zeros((B, H), jnp.float32)
    outs = []
    for t in range(T):
        gates = x[t] @ w_ih.T + b_ih + h @ w_hh.T + b_hh
        i_g = jax.nn.sigmoid(gates[:, 0 * H:1 * H])
        f_g = jax.nn.sigmoid(gates[:, 1 * H:2 * H])
        g_g = jnp.tanh(gates[:, 2 * H:3 * H])
        o_g = jax.nn.sigmoid(gates[:, 3 * H:4 * H])
        c = f_g * c + i_g * g_g
        h = o_g * jnp.tanh(c)
        outs.append(h)
    return jnp.stack(outs, axis=0)


def _rnn_reference(x, params_f, params_b=None):
    out_f = _lstm_reference(x, *params_f)
    if params_b is None:
        return out_f
    out_b = jnp.flip(_lstm_reference(jnp.flip(x, axis=0), *params_b), axis=0)
    return jnp.concatenate((out_f, out_b), axis=2)


if __name__ == "__main__":
    # RNN(input_dim=16, out_dim=32, cell_type='lstm'), batch mode.
    T, B, input_dim, out_dim = 8, 2, 16, 32

    key = jax.random.PRNGKey(0)
    kx, kf, kb = jax.random.split(key, 3)
    x = jax.random.normal(kx, (T, B, input_dim), jnp.float32)

    # --- unidirectional (bi_dir=False): 2 time chunks of 4, f32 MXU ---
    params_f = init_lstm_cell_params(kf, input_dim, out_dim)
    out_uni = jax.block_until_ready(rnn_batch_forward(x, params_f, time_chunk=4))
    assert out_uni.shape == (T, B, out_dim), out_uni.shape
    ref_uni = _rnn_reference(x, params_f)
    assert jnp.allclose(out_uni, ref_uni, atol=1e-4, rtol=1e-4)

    # --- bidirectional (bi_dir=True): chunk=3 (T % chunk != 0 exercises the ---
    # --- masked padded steps and the reversed chunk walk), f32 MXU        ---
    hidden_dim = out_dim // 2
    params_bf = init_lstm_cell_params(kf, input_dim, hidden_dim)
    params_bb = init_lstm_cell_params(kb, input_dim, hidden_dim)
    out_bi = jax.block_until_ready(
        rnn_batch_forward(x, params_bf, params_bb, time_chunk=3))
    assert out_bi.shape == (T, B, out_dim), out_bi.shape
    ref_bi = _rnn_reference(x, params_bf, params_bb)
    assert jnp.allclose(out_bi, ref_bi, atol=1e-4, rtol=1e-4)

    # --- production dtype path: bf16 MXU operands, f32 gate math / state ---
    out_bf16 = jax.block_until_ready(
        rnn_batch_forward(x, params_bf, params_bb, matmul_dtype=jnp.bfloat16))
    assert out_bf16.shape == (T, B, out_dim), out_bf16.shape
    assert bool(jnp.all(jnp.isfinite(out_bf16)))
    assert jnp.allclose(out_bf16, ref_bi, atol=1e-1, rtol=1e-1)

    print("KERNEL_OK")
</pallas_src>

<mosaic_0001>
module attributes {stable_mosaic.version = 11 : i64} {
  func.func @_lstm_kernel(%arg0: i32, %arg1: i32, %arg2: memref<32x16xf32, #tpu.memory_space<vmem>>, %arg3: memref<1x16x512xf32, #tpu.memory_space<vmem>>, %arg4: memref<1x128x512xf32, #tpu.memory_space<vmem>>, %arg5: memref<1x1x512xf32, #tpu.memory_space<vmem>>, %arg6: memref<1x32x128xf32, #tpu.memory_space<vmem>>, %arg7: memref<32x512xf32, #tpu.memory_space<vmem>>, %arg8: memref<8x128xf32, #tpu.memory_space<vmem>>, %arg9: memref<8x128xf32, #tpu.memory_space<vmem>>) attributes {dimension_semantics = [#tpu.dimension_semantics<parallel>, #tpu.dimension_semantics<arbitrary>], iteration_bounds = array<i64: 1, 2>, scalar_prefetch = 0 : i64, scratch_operands = 3 : i64, tpu.core_type = #tpu.core_type<tc>, window_params = [{transform_indices = @transform_0, window_bounds = array<i64: 32, 16>}, {transform_indices = @transform_1, window_bounds = array<i64: 1, 16, 512>}, {transform_indices = @transform_2, window_bounds = array<i64: 1, 128, 512>}, {transform_indices = @transform_3, window_bounds = array<i64: 1, 1, 512>}, {transform_indices = @transform_4, window_bounds = array<i64: 1, 32, 128>}]} {
    %c1_i32 = arith.constant 1 : i32
    %0 = arith.subi %c1_i32, %arg0 : i32
    %1 = arith.muli %0, %arg1 : i32
    %c1_i32_0 = arith.constant 1 : i32
    %2 = arith.subi %c1_i32_0, %arg1 : i32
    %3 = arith.muli %arg0, %2 : i32
    %4 = arith.addi %1, %3 : i32
    %c0_i32 = arith.constant 0 : i32
    %5 = arith.cmpi eq, %arg1, %c0_i32 : i32
    %6 = arith.extui %5 : i1 to i32
    %c0_i32_1 = arith.constant 0 : i32
    %7 = arith.cmpi ne, %6, %c0_i32_1 : i32
    scf.if %7 {
      %cst_120 = arith.constant 0.000000e+00 : f32
      %229 = vector.broadcast %cst_120 : f32 to vector<8x128xf32>
      %c0_121 = arith.constant 0 : index
      %c0_122 = arith.constant 0 : index
      %230 = vector.load %arg8[%c0_121, %c0_122] : memref<8x128xf32, #tpu.memory_space<vmem>>, vector<8x128xf32>
      tpu.vector_store %arg8[%c0_121, %c0_122], %229 {strides = array<i32>} : memref<8x128xf32, #tpu.memory_space<vmem>>, vector<8x128xf32>,
      %cst_123 = arith.constant 0.000000e+00 : f32
      %231 = vector.broadcast %cst_123 : f32 to vector<8x128xf32>
      %c0_124 = arith.constant 0 : index
      %c0_125 = arith.constant 0 : index
      %232 = vector.load %arg9[%c0_124, %c0_125] : memref<8x128xf32, #tpu.memory_space<vmem>>, vector<8x128xf32>
      tpu.vector_store %arg9[%c0_124, %c0_125], %231 {strides = array<i32>} : memref<8x128xf32, #tpu.memory_space<vmem>>, vector<8x128xf32>,
    } else {
    }
    %c0 = arith.constant 0 : index
    %c0_2 = arith.constant 0 : index
    %8 = vector.load %arg2[%c0, %c0_2] : memref<32x16xf32, #tpu.memory_space<vmem>>, vector<32x16xf32>
    %c0_3 = arith.constant 0 : index
    %c0_4 = arith.constant 0 : index
    %c0_5 = arith.constant 0 : index
    %9 = vector.load %arg3[%c0_3, %c0_4, %c0_5] : memref<1x16x512xf32, #tpu.memory_space<vmem>>, vector<1x16x512xf32>
    %10 = vector.shape_cast %9 : vector<1x16x512xf32> to vector<16x512xf32>
    %cst = arith.constant dense<0.000000e+00> : vector<32x512xf32>
    %11 = tpu.matmul %8, %10, %cst {dimension_numbers = #tpu.dot_dimension_numbers<[1], [0], [0], [1], [0, 0, 1, 1], [], []>} : vector<32x16xf32>, vector<16x512xf32>, vector<32x512xf32> -> vector<32x512xf32>
    %c0_6 = arith.constant 0 : index
    %c0_7 = arith.constant 0 : index
    %c0_8 = arith.constant 0 : index
    %12 = vector.load %arg5[%c0_6, %c0_7, %c0_8] : memref<1x1x512xf32, #tpu.memory_space<vmem>>, vector<1x1x512xf32>
    %13 = vector.shape_cast %12 : vector<1x1x512xf32> to vector<1x512xf32>
    %14 = vector.broadcast %13 : vector<1x512xf32> to vector<32x512xf32>
    %15 = arith.addf %11, %14 : vector<32x512xf32>
    %c0_9 = arith.constant 0 : index
    %c0_10 = arith.constant 0 : index
    %16 = vector.load %arg7[%c0_9, %c0_10] : memref<32x512xf32, #tpu.memory_space<vmem>>, vector<32x512xf32>
    tpu.vector_store %arg7[%c0_9, %c0_10], %15 {strides = array<i32>} : memref<32x512xf32, #tpu.memory_space<vmem>>, vector<32x512xf32>,
    %c0_i32_11 = arith.constant 0 : i32
    %c1_i32_12 = arith.constant 1 : i32
    %17 = arith.subi %c1_i32_12, %arg0 : i32
    %18 = arith.muli %17, %c0_i32_11 : i32
    %c3_i32 = arith.constant 3 : i32
    %19 = arith.subi %c3_i32, %c0_i32_11 : i32
    %20 = arith.muli %arg0, %19 : i32
    %21 = arith.addi %18, %20 : i32
    %c4_i32 = arith.constant 4 : i32
    %22 = arith.muli %4, %c4_i32 : i32
    %23 = arith.addi %22, %21 : i32
    %c8_i32 = arith.constant 8 : i32
    %24 = arith.cmpi slt, %23, %c8_i32 : i32
    %c8_i32_13 = arith.constant 8 : i32
    %25 = arith.muli %21, %c8_i32_13 : i32
    %26 = tpu.assume_multiple %25, 8 : i32
    %27 = arith.index_cast %26 : i32 to index
    %c0_14 = arith.constant 0 : index
    %28 = vector.load %arg7[%27, %c0_14] : memref<32x512xf32, #tpu.memory_space<vmem>>, vector<8x512xf32>
    %c0_15 = arith.constant 0 : index
    %c0_16 = arith.constant 0 : index
    %29 = vector.load %arg8[%c0_15, %c0_16] : memref<8x128xf32, #tpu.memory_space<vmem>>, vector<8x128xf32>
    %c0_17 = arith.constant 0 : index
    %c0_18 = arith.constant 0 : index
    %c0_19 = arith.constant 0 : index
    %30 = vector.load %arg4[%c0_17, %c0_18, %c0_19] : memref<1x128x512xf32, #tpu.memory_space<vmem>>, vector<1x128x512xf32>
    %31 = vector.shape_cast %30 : vector<1x128x512xf32> to vector<128x512xf32>
    %cst_20 = arith.constant dense<0.000000e+00> : vector<8x512xf32>
    %32 = tpu.matmul %29, %31, %cst_20 {dimension_numbers = #tpu.dot_dimension_numbers<[1], [0], [0], [1], [0, 0, 1, 1], [], []>} : vector<8x128xf32>, vector<128x512xf32>, vector<8x512xf32> -> vector<8x512xf32>
    %33 = arith.addf %28, %32 : vector<8x512xf32>
    %34 = vector.extract_strided_slice %33 {offsets = [0, 0], sizes = [8, 128], strides = [1, 1]} : vector<8x512xf32> to vector<8x128xf32>
    %35 = arith.negf %34 : vector<8x128xf32>
    %36 = math.exp %35 : vector<8x128xf32>
    %cst_21 = arith.constant 1.000000e+00 : f32
    %37 = vector.broadcast %cst_21 : f32 to vector<8x128xf32>
    %38 = arith.addf %37, %36 : vector<8x128xf32>
    %39 = arith.divf %37, %38 : vector<8x128xf32>
    %40 = vector.extract_strided_slice %33 {offsets = [0, 128], sizes = [8, 128], strides = [1, 1]} : vector<8x512xf32> to vector<8x128xf32>
    %41 = arith.negf %40 : vector<8x128xf32>
    %42 = math.exp %41 : vector<8x128xf32>
    %cst_22 = arith.constant 1.000000e+00 : f32
    %43 = vector.broadcast %cst_22 : f32 to vector<8x128xf32>
    %44 = arith.addf %43, %42 : vector<8x128xf32>
    %45 = arith.divf %43, %44 : vector<8x128xf32>
    %46 = vector.extract_strided_slice %33 {offsets = [0, 256], sizes = [8, 128], strides = [1, 1]} : vector<8x512xf32> to vector<8x128xf32>
    %47 = math.tanh %46 : vector<8x128xf32>
    %48 = vector.extract_strided_slice %33 {offsets = [0, 384], sizes = [8, 128], strides = [1, 1]} : vector<8x512xf32> to vector<8x128xf32>
    %49 = arith.negf %48 : vector<8x128xf32>
    %50 = math.exp %49 : vector<8x128xf32>
    %cst_23 = arith.constant 1.000000e+00 : f32
    %51 = vector.broadcast %cst_23 : f32 to vector<8x128xf32>
    %52 = arith.addf %51, %50 : vector<8x128xf32>
    %53 = arith.divf %51, %52 : vector<8x128xf32>
    %c0_24 = arith.constant 0 : index
    %c0_25 = arith.constant 0 : index
    %54 = vector.load %arg9[%c0_24, %c0_25] : memref<8x128xf32, #tpu.memory_space<vmem>>, vector<8x128xf32>
    %55 = arith.mulf %45, %54 : vector<8x128xf32>
    %56 = arith.mulf %39, %47 : vector<8x128xf32>
    %57 = arith.addf %55, %56 : vector<8x128xf32>
    %58 = math.tanh %57 : vector<8x128xf32>
    %59 = arith.mulf %53, %58 : vector<8x128xf32>
    %c0_26 = arith.constant 0 : index
    %c0_27 = arith.constant 0 : index
    %60 = vector.load %arg9[%c0_26, %c0_27] : memref<8x128xf32, #tpu.memory_space<vmem>>, vector<8x128xf32>
    %61 = arith.select %24, %57, %60 : vector<8x128xf32>
    %c0_28 = arith.constant 0 : index
    %c0_29 = arith.constant 0 : index
    %62 = vector.load %arg8[%c0_28, %c0_29] : memref<8x128xf32, #tpu.memory_space<vmem>>, vector<8x128xf32>
    %63 = arith.select %24, %59, %62 : vector<8x128xf32>
    %c0_30 = arith.constant 0 : index
    %c0_31 = arith.constant 0 : index
    %64 = vector.load %arg9[%c0_30, %c0_31] : memref<8x128xf32, #tpu.memory_space<vmem>>, vector<8x128xf32>
    tpu.vector_store %arg9[%c0_30, %c0_31], %61 {strides = array<i32>} : memref<8x128xf32, #tpu.memory_space<vmem>>, vector<8x128xf32>,
    %c0_32 = arith.constant 0 : index
    %c0_33 = arith.constant 0 : index
    %65 = vector.load %arg8[%c0_32, %c0_33] : memref<8x128xf32, #tpu.memory_space<vmem>>, vector<8x128xf32>
    tpu.vector_store %arg8[%c0_32, %c0_33], %63 {strides = array<i32>} : memref<8x128xf32, #tpu.memory_space<vmem>>, vector<8x128xf32>,
    %c0_34 = arith.constant 0 : index
    %66 = arith.index_cast %26 : i32 to index
    %c0_35 = arith.constant 0 : index
    %67 = vector.load %arg6[%c0_34, %66, %c0_35] : memref<1x32x128xf32, #tpu.memory_space<vmem>>, vector<1x8x128xf32>
    %68 = vector.shape_cast %67 : vector<1x8x128xf32> to vector<8x128xf32>
    %69 = vector.shape_cast %63 : vector<8x128xf32> to vector<1x8x128xf32>
    tpu.vector_store %arg6[%c0_34, %66, %c0_35], %69 {strides = array<i32>} : memref<1x32x128xf32, #tpu.memory_space<vmem>>, vector<1x8x128xf32>,
    %c1_i32_36 = arith.constant 1 : i32
    %c1_i32_37 = arith.constant 1 : i32
    %70 = arith.subi %c1_i32_37, %arg0 : i32
    %71 = arith.muli %70, %c1_i32_36 : i32
    %c3_i32_38 = arith.constant 3 : i32
    %72 = arith.subi %c3_i32_38, %c1_i32_36 : i32
    %73 = arith.muli %arg0, %72 : i32
    %74 = arith.addi %71, %73 : i32
    %c4_i32_39 = arith.constant 4 : i32
    %75 = arith.muli %4, %c4_i32_39 : i32
    %76 = arith.addi %75, %74 : i32
    %c8_i32_40 = arith.constant 8 : i32
    %77 = arith.cmpi slt, %76, %c8_i32_40 : i32
    %c8_i32_41 = arith.constant 8 : i32
    %78 = arith.muli %74, %c8_i32_41 : i32
    %79 = tpu.assume_multiple %78, 8 : i32
    %80 = arith.index_cast %79 : i32 to index
    %c0_42 = arith.constant 0 : index
    %81 = vector.load %arg7[%80, %c0_42] : memref<32x512xf32, #tpu.memory_space<vmem>>, vector<8x512xf32>
    %c0_43 = arith.constant 0 : index
    %c0_44 = arith.constant 0 : index
    %82 = vector.load %arg8[%c0_43, %c0_44] : memref<8x128xf32, #tpu.memory_space<vmem>>, vector<8x128xf32>
    %c0_45 = arith.constant 0 : index
    %c0_46 = arith.constant 0 : index
    %c0_47 = arith.constant 0 : index
    %83 = vector.load %arg4[%c0_45, %c0_46, %c0_47] : memref<1x128x512xf32, #tpu.memory_space<vmem>>, vector<1x128x512xf32>
    %84 = vector.shape_cast %83 : vector<1x128x512xf32> to vector<128x512xf32>
    %cst_48 = arith.constant dense<0.000000e+00> : vector<8x512xf32>
    %85 = tpu.matmul %82, %84, %cst_48 {dimension_numbers = #tpu.dot_dimension_numbers<[1], [0], [0], [1], [0, 0, 1, 1], [], []>} : vector<8x128xf32>, vector<128x512xf32>, vector<8x512xf32> -> vector<8x512xf32>
    %86 = arith.addf %81, %85 : vector<8x512xf32>
    %87 = vector.extract_strided_slice %86 {offsets = [0, 0], sizes = [8, 128], strides = [1, 1]} : vector<8x512xf32> to vector<8x128xf32>
    %88 = arith.negf %87 : vector<8x128xf32>
    %89 = math.exp %88 : vector<8x128xf32>
    %cst_49 = arith.constant 1.000000e+00 : f32
    %90 = vector.broadcast %cst_49 : f32 to vector<8x128xf32>
    %91 = arith.addf %90, %89 : vector<8x128xf32>
    %92 = arith.divf %90, %91 : vector<8x128xf32>
    %93 = vector.extract_strided_slice %86 {offsets = [0, 128], sizes = [8, 128], strides = [1, 1]} : vector<8x512xf32> to vector<8x128xf32>
    %94 = arith.negf %93 : vector<8x128xf32>
    %95 = math.exp %94 : vector<8x128xf32>
    %cst_50 = arith.constant 1.000000e+00 : f32
    %96 = vector.broadcast %cst_50 : f32 to vector<8x128xf32>
    %97 = arith.addf %96, %95 : vector<8x128xf32>
    %98 = arith.divf %96, %97 : vector<8x128xf32>
    %99 = vector.extract_strided_slice %86 {offsets = [0, 256], sizes = [8, 128], strides = [1, 1]} : vector<8x512xf32> to vector<8x128xf32>
    %100 = math.tanh %99 : vector<8x128xf32>
    %101 = vector.extract_strided_slice %86 {offsets = [0, 384], sizes = [8, 128], strides = [1, 1]} : vector<8x512xf32> to vector<8x128xf32>
    %102 = arith.negf %101 : vector<8x128xf32>
    %103 = math.exp %102 : vector<8x128xf32>
    %cst_51 = arith.constant 1.000000e+00 : f32
    %104 = vector.broadcast %cst_51 : f32 to vector<8x128xf32>
    %105 = arith.addf %104, %103 : vector<8x128xf32>
    %106 = arith.divf %104, %105 : vector<8x128xf32>
    %c0_52 = arith.constant 0 : index
    %c0_53 = arith.constant 0 : index
    %107 = vector.load %arg9[%c0_52, %c0_53] : memref<8x128xf32, #tpu.memory_space<vmem>>, vector<8x128xf32>
    %108 = arith.mulf %98, %107 : vector<8x128xf32>
    %109 = arith.mulf %92, %100 : vector<8x128xf32>
    %110 = arith.addf %108, %109 : vector<8x128xf32>
    %111 = math.tanh %110 : vector<8x128xf32>
    %112 = arith.mulf %106, %111 : vector<8x128xf32>
    %c0_54 = arith.constant 0 : index
    %c0_55 = arith.constant 0 : index
    %113 = vector.load %arg9[%c0_54, %c0_55] : memref<8x128xf32, #tpu.memory_space<vmem>>, vector<8x128xf32>
    %114 = arith.select %77, %110, %113 : vector<8x128xf32>
    %c0_56 = arith.constant 0 : index
    %c0_57 = arith.constant 0 : index
    %115 = vector.load %arg8[%c0_56, %c0_57] : memref<8x128xf32, #tpu.memory_space<vmem>>, vector<8x128xf32>
    %116 = arith.select %77, %112, %115 : vector<8x128xf32>
    %c0_58 = arith.constant 0 : index
    %c0_59 = arith.constant 0 : index
    %117 = vector.load %arg9[%c0_58, %c0_59] : memref<8x128xf32, #tpu.memory_space<vmem>>, vector<8x128xf32>
    tpu.vector_store %arg9[%c0_58, %c0_59], %114 {strides = array<i32>} : memref<8x128xf32, #tpu.memory_space<vmem>>, vector<8x128xf32>,
    %c0_60 = arith.constant 0 : index
    %c0_61 = arith.constant 0 : index
    %118 = vector.load %arg8[%c0_60, %c0_61] : memref<8x128xf32, #tpu.memory_space<vmem>>, vector<8x128xf32>
    tpu.vector_store %arg8[%c0_60, %c0_61], %116 {strides = array<i32>} : memref<8x128xf32, #tpu.memory_space<vmem>>, vector<8x128xf32>,
    %c0_62 = arith.constant 0 : index
    %119 = arith.index_cast %79 : i32 to index
    %c0_63 = arith.constant 0 : index
    %120 = vector.load %arg6[%c0_62, %119, %c0_63] : memref<1x32x128xf32, #tpu.memory_space<vmem>>, vector<1x8x128xf32>
    %121 = vector.shape_cast %120 : vector<1x8x128xf32> to vector<8x128xf32>
    %122 = vector.shape_cast %116 : vector<8x128xf32> to vector<1x8x128xf32>
    tpu.vector_store %arg6[%c0_62, %119, %c0_63], %122 {strides = array<i32>} : memref<1x32x128xf32, #tpu.memory_space<vmem>>, vector<1x8x128xf32>,
    %c2_i32 = arith.constant 2 : i32
    %c1_i32_64 = arith.constant 1 : i32
    %123 = arith.subi %c1_i32_64, %arg0 : i32
    %124 = arith.muli %123, %c2_i32 : i32
    %c3_i32_65 = arith.constant 3 : i32
    %125 = arith.subi %c3_i32_65, %c2_i32 : i32
    %126 = arith.muli %arg0, %125 : i32
    %127 = arith.addi %124, %126 : i32
    %c4_i32_66 = arith.constant 4 : i32
    %128 = arith.muli %4, %c4_i32_66 : i32
    %129 = arith.addi %128, %127 : i32
    %c8_i32_67 = arith.constant 8 : i32
    %130 = arith.cmpi slt, %129, %c8_i32_67 : i32
    %c8_i32_68 = arith.constant 8 : i32
    %131 = arith.muli %127, %c8_i32_68 : i32
    %132 = tpu.assume_multiple %131, 8 : i32
    %133 = arith.index_cast %132 : i32 to index
    %c0_69 = arith.constant 0 : index
    %134 = vector.load %arg7[%133, %c0_69] : memref<32x512xf32, #tpu.memory_space<vmem>>, vector<8x512xf32>
    %c0_70 = arith.constant 0 : index
    %c0_71 = arith.constant 0 : index
    %135 = vector.load %arg8[%c0_70, %c0_71] : memref<8x128xf32, #tpu.memory_space<vmem>>, vector<8x128xf32>
    %c0_72 = arith.constant 0 : index
    %c0_73 = arith.constant 0 : index
    %c0_74 = arith.constant 0 : index
    %136 = vector.load %arg4[%c0_72, %c0_73, %c0_74] : memref<1x128x512xf32, #tpu.memory_space<vmem>>, vector<1x128x512xf32>
    %137 = vector.shape_cast %136 : vector<1x128x512xf32> to vector<128x512xf32>
    %cst_75 = arith.constant dense<0.000000e+00> : vector<8x512xf32>
    %138 = tpu.matmul %135, %137, %cst_75 {dimension_numbers = #tpu.dot_dimension_numbers<[1], [0], [0], [1], [0, 0, 1, 1], [], []>} : vector<8x128xf32>, vector<128x512xf32>, vector<8x512xf32> -> vector<8x512xf32>
    %139 = arith.addf %134, %138 : vector<8x512xf32>
    %140 = vector.extract_strided_slice %139 {offsets = [0, 0], sizes = [8, 128], strides = [1, 1]} : vector<8x512xf32> to vector<8x128xf32>
    %141 = arith.negf %140 : vector<8x128xf32>
    %142 = math.exp %141 : vector<8x128xf32>
    %cst_76 = arith.constant 1.000000e+00 : f32
    %143 = vector.broadcast %cst_76 : f32 to vector<8x128xf32>
    %144 = arith.addf %143, %142 : vector<8x128xf32>
    %145 = arith.divf %143, %144 : vector<8x128xf32>
    %146 = vector.extract_strided_slice %139 {offsets = [0, 128], sizes = [8, 128], strides = [1, 1]} : vector<8x512xf32> to vector<8x128xf32>
    %147 = arith.negf %146 : vector<8x128xf32>
    %148 = math.exp %147 : vector<8x128xf32>
    %cst_77 = arith.constant 1.000000e+00 : f32
    %149 = vector.broadcast %cst_77 : f32 to vector<8x128xf32>
    %150 = arith.addf %149, %148 : vector<8x128xf32>
    %151 = arith.divf %149, %150 : vector<8x128xf32>
    %152 = vector.extract_strided_slice %139 {offsets = [0, 256], sizes = [8, 128], strides = [1, 1]} : vector<8x512xf32> to vector<8x128xf32>
    %153 = math.tanh %152 : vector<8x128xf32>
    %154 = vector.extract_strided_slice %139 {offsets = [0, 384], sizes = [8, 128], strides = [1, 1]} : vector<8x512xf32> to vector<8x128xf32>
    %155 = arith.negf %154 : vector<8x128xf32>
    %156 = math.exp %155 : vector<8x128xf32>
    %cst_78 = arith.constant 1.000000e+00 : f32
    %157 = vector.broadcast %cst_78 : f32 to vector<8x128xf32>
    %158 = arith.addf %157, %156 : vector<8x128xf32>
    %159 = arith.divf %157, %158 : vector<8x128xf32>
    %c0_79 = arith.constant 0 : index
    %c0_80 = arith.constant 0 : index
    %160 = vector.load %arg9[%c0_79, %c0_80] : memref<8x128xf32, #tpu.memory_space<vmem>>, vector<8x128xf32>
    %161 = arith.mulf %151, %160 : vector<8x128xf32>
    %162 = arith.mulf %145, %153 : vector<8x128xf32>
    %163 = arith.addf %161, %162 : vector<8x128xf32>
    %164 = math.tanh %163 : vector<8x128xf32>
    %165 = arith.mulf %159, %164 : vector<8x128xf32>
    %c0_81 = arith.constant 0 : index
    %c0_82 = arith.constant 0 : index
    %166 = vector.load %arg9[%c0_81, %c0_82] : memref<8x128xf32, #tpu.memory_space<vmem>>, vector<8x128xf32>
    %167 = arith.select %130, %163, %166 : vector<8x128xf32>
    %c0_83 = arith.constant 0 : index
    %c0_84 = arith.constant 0 : index
    %168 = vector.load %arg8[%c0_83, %c0_84] : memref<8x128xf32, #tpu.memory_space<vmem>>, vector<8x128xf32>
    %169 = arith.select %130, %165, %168 : vector<8x128xf32>
    %c0_85 = arith.constant 0 : index
    %c0_86 = arith.constant 0 : index
    %170 = vector.load %arg9[%c0_85, %c0_86] : memref<8x128xf32, #tpu.memory_space<vmem>>, vector<8x128xf32>
    tpu.vector_store %arg9[%c0_85, %c0_86], %167 {strides = array<i32>} : memref<8x128xf32, #tpu.memory_space<vmem>>, vector<8x128xf32>,
    %c0_87 = arith.constant 0 : index
    %c0_88 = arith.constant 0 : index
    %171 = vector.load %arg8[%c0_87, %c0_88] : memref<8x128xf32, #tpu.memory_space<vmem>>, vector<8x128xf32>
    tpu.vector_store %arg8[%c0_87, %c0_88], %169 {strides = array<i32>} : memref<8x128xf32, #tpu.memory_space<vmem>>, vector<8x128xf32>,
    %c0_89 = arith.constant 0 : index
    %172 = arith.index_cast %132 : i32 to index
    %c0_90 = arith.constant 0 : index
    %173 = vector.load %arg6[%c0_89, %172, %c0_90] : memref<1x32x128xf32, #tpu.memory_space<vmem>>, vector<1x8x128xf32>
    %174 = vector.shape_cast %173 : vector<1x8x128xf32> to vector<8x128xf32>
    %175 = vector.shape_cast %169 : vector<8x128xf32> to vector<1x8x128xf32>
    tpu.vector_store %arg6[%c0_89, %172, %c0_90], %175 {strides = array<i32>} : memref<1x32x128xf32, #tpu.memory_space<vmem>>, vector<1x8x128xf32>,
    %c3_i32_91 = arith.constant 3 : i32
    %c1_i32_92 = arith.constant 1 : i32
    %176 = arith.subi %c1_i32_92, %arg0 : i32
    %177 = arith.muli %176, %c3_i32_91 : i32
    %c3_i32_93 = arith.constant 3 : i32
    %178 = arith.subi %c3_i32_93, %c3_i32_91 : i32
    %179 = arith.muli %arg0, %178 : i32
    %180 = arith.addi %177, %179 : i32
    %c4_i32_94 = arith.constant 4 : i32
    %181 = arith.muli %4, %c4_i32_94 : i32
    %182 = arith.addi %181, %180 : i32
    %c8_i32_95 = arith.constant 8 : i32
    %183 = arith.cmpi slt, %182, %c8_i32_95 : i32
    %c8_i32_96 = arith.constant 8 : i32
    %184 = arith.muli %180, %c8_i32_96 : i32
    %185 = tpu.assume_multiple %184, 8 : i32
    %186 = arith.index_cast %185 : i32 to index
    %c0_97 = arith.constant 0 : index
    %187 = vector.load %arg7[%186, %c0_97] : memref<32x512xf32, #tpu.memory_space<vmem>>, vector<8x512xf32>
    %c0_98 = arith.constant 0 : index
    %c0_99 = arith.constant 0 : index
    %188 = vector.load %arg8[%c0_98, %c0_99] : memref<8x128xf32, #tpu.memory_space<vmem>>, vector<8x128xf32>
    %c0_100 = arith.constant 0 : index
    %c0_101 = arith.constant 0 : index
    %c0_102 = arith.constant 0 : index
    %189 = vector.load %arg4[%c0_100, %c0_101, %c0_102] : memref<1x128x512xf32, #tpu.memory_space<vmem>>, vector<1x128x512xf32>
    %190 = vector.shape_cast %189 : vector<1x128x512xf32> to vector<128x512xf32>
    %cst_103 = arith.constant dense<0.000000e+00> : vector<8x512xf32>
    %191 = tpu.matmul %188, %190, %cst_103 {dimension_numbers = #tpu.dot_dimension_numbers<[1], [0], [0], [1], [0, 0, 1, 1], [], []>} : vector<8x128xf32>, vector<128x512xf32>, vector<8x512xf32> -> vector<8x512xf32>
    %192 = arith.addf %187, %191 : vector<8x512xf32>
    %193 = vector.extract_strided_slice %192 {offsets = [0, 0], sizes = [8, 128], strides = [1, 1]} : vector<8x512xf32> to vector<8x128xf32>
    %194 = arith.negf %193 : vector<8x128xf32>
    %195 = math.exp %194 : vector<8x128xf32>
    %cst_104 = arith.constant 1.000000e+00 : f32
    %196 = vector.broadcast %cst_104 : f32 to vector<8x128xf32>
    %197 = arith.addf %196, %195 : vector<8x128xf32>
    %198 = arith.divf %196, %197 : vector<8x128xf32>
    %199 = vector.extract_strided_slice %192 {offsets = [0, 128], sizes = [8, 128], strides = [1, 1]} : vector<8x512xf32> to vector<8x128xf32>
    %200 = arith.negf %199 : vector<8x128xf32>
    %201 = math.exp %200 : vector<8x128xf32>
    %cst_105 = arith.constant 1.000000e+00 : f32
    %202 = vector.broadcast %cst_105 : f32 to vector<8x128xf32>
    %203 = arith.addf %202, %201 : vector<8x128xf32>
    %204 = arith.divf %202, %203 : vector<8x128xf32>
    %205 = vector.extract_strided_slice %192 {offsets = [0, 256], sizes = [8, 128], strides = [1, 1]} : vector<8x512xf32> to vector<8x128xf32>
    %206 = math.tanh %205 : vector<8x128xf32>
    %207 = vector.extract_strided_slice %192 {offsets = [0, 384], sizes = [8, 128], strides = [1, 1]} : vector<8x512xf32> to vector<8x128xf32>
    %208 = arith.negf %207 : vector<8x128xf32>
    %209 = math.exp %208 : vector<8x128xf32>
    %cst_106 = arith.constant 1.000000e+00 : f32
    %210 = vector.broadcast %cst_106 : f32 to vector<8x128xf32>
    %211 = arith.addf %210, %209 : vector<8x128xf32>
    %212 = arith.divf %210, %211 : vector<8x128xf32>
    %c0_107 = arith.constant 0 : index
    %c0_108 = arith.constant 0 : index
    %213 = vector.load %arg9[%c0_107, %c0_108] : memref<8x128xf32, #tpu.memory_space<vmem>>, vector<8x128xf32>
    %214 = arith.mulf %204, %213 : vector<8x128xf32>
    %215 = arith.mulf %198, %206 : vector<8x128xf32>
    %216 = arith.addf %214, %215 : vector<8x128xf32>
    %217 = math.tanh %216 : vector<8x128xf32>
    %218 = arith.mulf %212, %217 : vector<8x128xf32>
    %c0_109 = arith.constant 0 : index
    %c0_110 = arith.constant 0 : index
    %219 = vector.load %arg9[%c0_109, %c0_110] : memref<8x128xf32, #tpu.memory_space<vmem>>, vector<8x128xf32>
    %220 = arith.select %183, %216, %219 : vector<8x128xf32>
    %c0_111 = arith.constant 0 : index
    %c0_112 = arith.constant 0 : index
    %221 = vector.load %arg8[%c0_111, %c0_112] : memref<8x128xf32, #tpu.memory_space<vmem>>, vector<8x128xf32>
    %222 = arith.select %183, %218, %221 : vector<8x128xf32>
    %c0_113 = arith.constant 0 : index
    %c0_114 = arith.constant 0 : index
    %223 = vector.load %arg9[%c0_113, %c0_114] : memref<8x128xf32, #tpu.memory_space<vmem>>, vector<8x128xf32>
    tpu.vector_store %arg9[%c0_113, %c0_114], %220 {strides = array<i32>} : memref<8x128xf32, #tpu.memory_space<vmem>>, vector<8x128xf32>,
    %c0_115 = arith.constant 0 : index
    %c0_116 = arith.constant 0 : index
    %224 = vector.load %arg8[%c0_115, %c0_116] : memref<8x128xf32, #tpu.memory_space<vmem>>, vector<8x128xf32>
    tpu.vector_store %arg8[%c0_115, %c0_116], %222 {strides = array<i32>} : memref<8x128xf32, #tpu.memory_space<vmem>>, vector<8x128xf32>,
    %c0_117 = arith.constant 0 : index
    %225 = arith.index_cast %185 : i32 to index
    %c0_118 = arith.constant 0 : index
    %226 = vector.load %arg6[%c0_117, %225, %c0_118] : memref<1x32x128xf32, #tpu.memory_space<vmem>>, vector<1x8x128xf32>
    %227 = vector.shape_cast %226 : vector<1x8x128xf32> to vector<8x128xf32>
    %228 = vector.shape_cast %222 : vector<8x128xf32> to vector<1x8x128xf32>
    tpu.vector_store %arg6[%c0_117, %225, %c0_118], %228 {strides = array<i32>} : memref<1x32x128xf32, #tpu.memory_space<vmem>>, vector<1x8x128xf32>,
    %c4_i32_119 = arith.constant 4 : i32
    return
  }
  func.func @transform_0(%arg0: i32, %arg1: i32) -> (i32, i32) {
    %c1_i32 = arith.constant 1 : i32
    %0 = arith.subi %c1_i32, %arg0 : i32
    %1 = arith.muli %0, %arg1 : i32
    %c1_i32_0 = arith.constant 1 : i32
    %2 = arith.subi %c1_i32_0, %arg1 : i32
    %3 = arith.muli %arg0, %2 : i32
    %4 = arith.addi %1, %3 : i32
    %c0_i32 = arith.constant 0 : i32
    %c0_i32_1 = arith.constant 0 : i32
    return %4, %c0_i32 : i32, i32
  }
  func.func @transform_1(%arg0: i32, %arg1: i32) -> (i32, i32, i32) {
    %c0_i32 = arith.constant 0 : i32
    %c0_i32_0 = arith.constant 0 : i32
    %c0_i32_1 = arith.constant 0 : i32
    return %arg0, %c0_i32, %c0_i32_0 : i32, i32, i32
  }
  func.func @transform_2(%arg0: i32, %arg1: i32) -> (i32, i32, i32) {
    %c0_i32 = arith.constant 0 : i32
    %c0_i32_0 = arith.constant 0 : i32
    %c0_i32_1 = arith.constant 0 : i32
    return %arg0, %c0_i32, %c0_i32_0 : i32, i32, i32
  }
  func.func @transform_3(%arg0: i32, %arg1: i32) -> (i32, i32, i32) {
    %c0_i32 = arith.constant 0 : i32
    %c0_i32_0 = arith.constant 0 : i32
    %c0_i32_1 = arith.constant 0 : i32
    return %arg0, %c0_i32, %c0_i32_0 : i32, i32, i32
  }
  func.func @transform_4(%arg0: i32, %arg1: i32) -> (i32, i32, i32) {
    %c1_i32 = arith.constant 1 : i32
    %0 = arith.subi %c1_i32, %arg0 : i32
    %1 = arith.muli %0, %arg1 : i32
    %c1_i32_0 = arith.constant 1 : i32
    %2 = arith.subi %c1_i32_0, %arg1 : i32
    %3 = arith.muli %arg0, %2 : i32
    %4 = arith.addi %1, %3 : i32
    %c0_i32 = arith.constant 0 : i32
    %c0_i32_1 = arith.constant 0 : i32
    return %arg0, %4, %c0_i32 : i32, i32, i32
  }
}

</mosaic_0001>

<llo_original>
// kernel: tpu_custom_call.1
$region0: #{tpu_custom_call.1}
  #allocation0 [shape = 'u32[]', space=smem, size = 0x4, offset = 0x4, fixed_abs, tag = 'smem constant byte address 0x4 - core index']
  #allocation1 [shape = 'u32[144,128]{1,0:T(1,128)}', space=vmem, size = 0x12000, scoped, tag = 'internal scratch']
  #allocation2 [shape = 'f32[32,512]{1,0:T(8,128)}', space=vmem, size = 0x10000, scoped, tag = 'scratch operand']
  #allocation3 [shape = 'f32[8,128]{1,0:T(8,128)}', space=vmem, size = 0x1000, scoped, tag = 'scratch operand']
  #allocation4 [shape = 'f32[8,128]{1,0:T(8,128)}', space=vmem, size = 0x1000, scoped, tag = 'scratch operand']
  %s0 = inlined_call_operand.vmem [shape: f32[64,16], index: 0, kind: input, shape index: {}]
  %s1 = inlined_call_operand.vmem [shape: f32[1,16,512], index: 1, kind: input, shape index: {}]
  %s2 = inlined_call_operand.hbm [shape: f32[1,128,512], index: 2, kind: input, shape index: {}]
  %s3 = inlined_call_operand.vmem [shape: f32[1,1,512], index: 3, kind: input, shape index: {}]
  %s4 = inlined_call_operand.hbm [shape: f32[1,64,128], index: 4, kind: output, shape index: {}]
  %s5 = sld [smem:[#allocation0]]
  $region57: #{tpu_custom_call.1} parent=0
    _
  %s7 = ssub.s32 1, %s5
  %s8 = scalar_select 0, %s7, %s5
  $region1: #{tpu_custom_call.1} parent=0
    #allocation5 [shape = 'u8[262144]{0}', space=vmem, size = 0x40000, scoped, tag = 'input window, operand 2, single buffered']
    #allocation6 [shape = 's32[2]{0}', space=sflag, size = 0x8, scoped, tag = 'scoped memory for tpu_custom_call.1']
    #allocation7 [shape = 's32[2]{0}', space=sflag, size = 0x8, scoped, tag = 'scoped memory for tpu_custom_call.1']
    #allocation8 [shape = 'u8[32768]{0}', space=vmem, size = 0x8000, scoped, tag = 'output window, operand 0']
    %9 = vsyncpa [#allocation6], 0
    %10 = vsyncpa [#allocation7], 0
    %s11 = scalar_lea.sflag [#allocation7], 1
    %12 = vsyncpa %s11, 0
    loop: start=0, step=1, limit=4
    $region2: #{tpu_custom_call.1} parent=1 // loop_pre_header
      _
    $region3: #{tpu_custom_call.1} parent=1 // loop_header
      %s14 = sphi 0, %s18
      %p15 = scmp.ge.s32.totalorder %s14, 4
      %s21 = sphi 0, %s33
      %s22 = sphi 0, %s29
      %s23 = sphi 0, %s21
      %s24 = sphi 0, %s22
      %s25 = sphi 0, %s23
      %s26 = sphi 0, %s24
      %s46 = sphi 0, %s48
      %s49 = sphi 0, %s46
      %s50 = sphi 0, %s49
      %s66 = sphi 0, %s50
      %s72 = sphi 0, %s74
      %s75 = sphi 0, %s72
      %s76 = sphi 0, %s75
      %s92 = sphi 0, %s76
      %s98 = sphi 0, %s100
      %s101 = sphi 0, %s98
      %s102 = sphi 0, %s101
      %s118 = sphi 0, %s102
      %s124 = sphi 0, %s126
      %s127 = sphi 0, %s124
      %s128 = sphi 0, %s127
      %s144 = sphi 0, %s128
      %s162 = sphi 0, %s164
      %s165 = sphi 0, %s162
      %s166 = sphi 0, %s165
      %s182 = sphi 0, %s166
    $region4: #{tpu_custom_call.1} parent=1 // loop_header_branch
      %17 = sbr.rel (%p15) target = $region8
    $region5: #{tpu_custom_call.1} parent=1 // loop_body
      %s19 = ssub.s32 %s14, 1
      %s20 = ssub.s32 %s14, 2
      %s27 = sadd.s32 1, %s22
      %p28 = scmp.ge.s32.totalorder %s27, 2
      %s29 = scalar_select %p28, 0, %s27
      %s30 = sadd.s32 1, %s21
      %s31 = scalar_select %p28, %s30, %s21
      %p32 = scmp.ge.s32.totalorder %s31, 1
      %s33 = scalar_select %p32, 0, %s31
      %s34 = ssub.s32 1, %s21
      %s35 = smul.u32 %s34, %s22
      %s36 = ssub.s32 1, %s22
      %s37 = smul.u32 %s21, %s36
      %s38 = sadd.s32 %s35, %s37
      %s39 = ssub.s32 1, %s33
      %s40 = smul.u32 %s39, %s29
      %s41 = ssub.s32 1, %s29
      %s42 = smul.u32 %s33, %s41
      %s43 = sadd.s32 %s40, %s42
      %s44 = ssub.s32 %s38, %s43
      %p45 = scmp.eq.s32.totalorder %s44, 0
      %s47 = sadd.s32 %s46, 1
      %s48 = scalar_select %p45, %s46, %s47
      %p51 = pneg %p45
      %p52 = scmp.eq.s32.totalorder %s14, 1
      %p53 = por %p51, %p52
      %p54 = scmp.ne.s32.totalorder %s46, %s49
      %p55 = scmp.eq.s32.totalorder %s14, 0
      %p56 = por %p54, %p55
      %p57 = scmp.ne.s32.totalorder %s46, %s49
      %p58 = scmp.eq.s32.totalorder %s19, 1
      %p59 = por %p57, %p58
      %p60 = scmp.ne.s32.totalorder %s49, %s50
      %p61 = scmp.eq.s32.totalorder %s19, 0
      %p62 = por %p60, %p61
      %p63 = scmp.ne.s32.totalorder %s49, %s50
      %p64 = scmp.eq.s32.totalorder %s20, 1
      %p65 = por %p63, %p64
      %p67 = scmp.ne.s32.totalorder %s50, %s66
      %p68 = scmp.eq.s32.totalorder %s20, 0
      %p69 = por %p67, %p68
      %s70 = ssub.s32 %s21, %s33
      %p71 = scmp.eq.s32.totalorder %s70, 0
      %s73 = sadd.s32 %s72, 1
      %s74 = scalar_select %p71, %s72, %s73
      %p77 = pneg %p71
      %p78 = scmp.eq.s32.totalorder %s14, 1
      %p79 = por %p77, %p78
      %p80 = scmp.ne.s32.totalorder %s72, %s75
      %p81 = scmp.eq.s32.totalorder %s14, 0
      %p82 = por %p80, %p81
      %p83 = scmp.ne.s32.totalorder %s72, %s75
      %p84 = scmp.eq.s32.totalorder %s19, 1
      %p85 = por %p83, %p84
      %p86 = scmp.ne.s32.totalorder %s75, %s76
      %p87 = scmp.eq.s32.totalorder %s19, 0
      %p88 = por %p86, %p87
      %p89 = scmp.ne.s32.totalorder %s75, %s76
      %p90 = scmp.eq.s32.totalorder %s20, 1
      %p91 = por %p89, %p90
      %p93 = scmp.ne.s32.totalorder %s76, %s92
      %p94 = scmp.eq.s32.totalorder %s20, 0
      %p95 = por %p93, %p94
      %s96 = ssub.s32 %s21, %s33
      %p97 = scmp.eq.s32.totalorder %s96, 0
      %s99 = sadd.s32 %s98, 1
      %s100 = scalar_select %p97, %s98, %s99
      %p103 = pneg %p97
      %p104 = scmp.eq.s32.totalorder %s14, 1
      %p105 = por %p103, %p104
      %p106 = scmp.ne.s32.totalorder %s98, %s101
      %p107 = scmp.eq.s32.totalorder %s14, 0
      %p108 = por %p106, %p107
      %p109 = scmp.ne.s32.totalorder %s98, %s101
      %p110 = scmp.eq.s32.totalorder %s19, 1
      %p111 = por %p109, %p110
      %p112 = scmp.ne.s32.totalorder %s101, %s102
      %p113 = scmp.eq.s32.totalorder %s19, 0
      %p114 = por %p112, %p113
      %p115 = scmp.ne.s32.totalorder %s101, %s102
      %p116 = scmp.eq.s32.totalorder %s20, 1
      %p117 = por %p115, %p116
      %p119 = scmp.ne.s32.totalorder %s102, %s118
      %p120 = scmp.eq.s32.totalorder %s20, 0
      %p121 = por %p119, %p120
      %s122 = ssub.s32 %s21, %s33
      %p123 = scmp.eq.s32.totalorder %s122, 0
      %s125 = sadd.s32 %s124, 1
      %s126 = scalar_select %p123, %s124, %s125
      %p129 = pneg %p123
      %p130 = scmp.eq.s32.totalorder %s14, 1
      %p131 = por %p129, %p130
      %p132 = scmp.ne.s32.totalorder %s124, %s127
      %p133 = scmp.eq.s32.totalorder %s14, 0
      %p134 = por %p132, %p133
      %p135 = scmp.ne.s32.totalorder %s124, %s127
      %p136 = scmp.eq.s32.totalorder %s19, 1
      %p137 = por %p135, %p136
      %p138 = scmp.ne.s32.totalorder %s127, %s128
      %p139 = scmp.eq.s32.totalorder %s19, 0
      %p140 = por %p138, %p139
      %p141 = scmp.ne.s32.totalorder %s127, %s128
      %p142 = scmp.eq.s32.totalorder %s20, 1
      %p143 = por %p141, %p142
      %p145 = scmp.ne.s32.totalorder %s128, %s144
      %p146 = scmp.eq.s32.totalorder %s20, 0
      %p147 = por %p145, %p146
      %s148 = ssub.s32 1, %s21
      %s149 = smul.u32 %s148, %s22
      %s150 = ssub.s32 1, %s22
      %s151 = smul.u32 %s21, %s150
      %s152 = sadd.s32 %s149, %s151
      %s153 = ssub.s32 1, %s33
      %s154 = smul.u32 %s153, %s29
      %s155 = ssub.s32 1, %s29
      %s156 = smul.u32 %s33, %s155
      %s157 = sadd.s32 %s154, %s156
      %s158 = ssub.s32 %s21, %s33
      %s159 = ssub.s32 %s152, %s157
      %s160 = sor.u32 %s158, %s159
      %p161 = scmp.eq.s32.totalorder %s160, 0
      %s163 = sadd.s32 %s162, 1
      %s164 = scalar_select %p161, %s162, %s163
      %p167 = pneg %p161
      %p168 = scmp.eq.s32.totalorder %s14, 1
      %p169 = por %p167, %p168
      %p170 = scmp.ne.s32.totalorder %s162, %s165
      %p171 = scmp.eq.s32.totalorder %s14, 0
      %p172 = por %p170, %p171
      %p173 = scmp.ne.s32.totalorder %s162, %s165
      %p174 = scmp.eq.s32.totalorder %s19, 1
      %p175 = por %p173, %p174
      %p176 = scmp.ne.s32.totalorder %s165, %s166
      %p177 = scmp.eq.s32.totalorder %s19, 0
      %p178 = por %p176, %p177
      %p179 = scmp.ne.s32.totalorder %s165, %s166
      %p180 = scmp.eq.s32.totalorder %s20, 1
      %p181 = por %p179, %p180
      %p183 = scmp.ne.s32.totalorder %s166, %s182
      %p184 = scmp.eq.s32.totalorder %s20, 0
      %p185 = por %p183, %p184
      %p186 = scmp.le.s32.totalorder 1, %s14
      %p187 = scmp.lt.s32.totalorder %s14, 3
      %p188 = pnand %p186, %p187
      %p189 = pneg %p188
      // Predicated region
      $region9: #{tpu_custom_call.1} parent=5 // pred_check
        _
      $region10: #{tpu_custom_call.1} parent=5 // pred_check_branch
        %191 = sbr.rel (%p188) target = $region12
      $region11: #{tpu_custom_call.1} parent=5 // pred_region
        %s192 = ssub.s32 %s14, 1
        // Predicated region
        $region13: #{tpu_custom_call.1} parent=11 // pred_check
          %p193 = pneg %p88
        $region14: #{tpu_custom_call.1} parent=11 // pred_check_branch
          %195 = sbr.rel (%p193) target = $region16
        $region15: #{tpu_custom_call.1} parent=11 // pred_region
          %p196 = scmp.lt.s32.totalorder %s23, 0
          %s197 = scalar_select %p196, %s23, 0
          %s198 = smul.addr %s197, 8
          %s199 = smul.addr %s198, 8
          %s200 = scalar_lea.vmem %s1, %s199
        $region16: #{tpu_custom_call.1} parent=11 // pred_fallthru
          _
        // Predicated region
        $region17: #{tpu_custom_call.1} parent=11 // pred_check
          %p201 = pneg %p114
        $region18: #{tpu_custom_call.1} parent=11 // pred_check_branch
          %203 = sbr.rel (%p201) target = $region20
        $region19: #{tpu_custom_call.1} parent=11 // pred_region
          %s205 = ssub.s32 8192, 8192
          %206 = vsyncadd [#allocation6], %s205
          %s207 = smul.addr %s23, 64
          %s208 = smul.addr %s207, 128
          %s209 = scalar_lea.hbm %s2, %s208
          %s210 = sshll.u32 [#allocation5], 4
          %s211 = int_to_ptr.vmem [resolvable:$true] %s210
          %216 = dma.hbm_to_vmem [thread:$0]  %s209, 8192, %s211, [#allocation6], 512, 512, 32
        $region20: #{tpu_custom_call.1} parent=11 // pred_fallthru
          _
        // Predicated region
        $region21: #{tpu_custom_call.1} parent=11 // pred_check
          %p217 = pneg %p140
        $region22: #{tpu_custom_call.1} parent=11 // pred_check_branch
          %219 = sbr.rel (%p217) target = $region24
        $region23: #{tpu_custom_call.1} parent=11 // pred_region
          %p220 = scmp.lt.s32.totalorder %s23, 0
          %s221 = scalar_select %p220, %s23, 0
          %s222 = smul.addr %s221, 4
          %s223 = scalar_lea.vmem %s3, %s222
        $region24: #{tpu_custom_call.1} parent=11 // pred_fallthru
          _
      $region12: #{tpu_custom_call.1} parent=5 // pred_fallthru
        _
      %p224 = scmp.lt.s32.totalorder %s14, 2
      // Predicated region
      $region25: #{tpu_custom_call.1} parent=5 // pred_check
        %p225 = pneg %p224
      $region26: #{tpu_custom_call.1} parent=5 // pred_check_branch
        %227 = sbr.rel (%p225) target = $region28
      $region27: #{tpu_custom_call.1} parent=5 // pred_region
        // Predicated region
        $region29: #{tpu_custom_call.1} parent=27 // pred_check
          %p228 = pneg %p56
        $region30: #{tpu_custom_call.1} parent=27 // pred_check_branch
          %230 = sbr.rel (%p228) target = $region32
        $region31: #{tpu_custom_call.1} parent=27 // pred_region
          %s231 = ssub.s32 1, %s21
          %s232 = smul.u32 %s231, %s22
          %s233 = ssub.s32 1, %s22
          %s234 = smul.u32 %s21, %s233
          %s235 = sadd.s32 %s232, %s234
          %s236 = smul.u32 4, %s235
          %p237 = scmp.lt.s32.totalorder %s236, 7
          %s238 = scalar_select %p237, %s236, 7
          %s239 = smul.addr %s238, 8
          %s240 = scalar_lea.vmem %s0, %s239
          %s241 = ssub.s32 1, %s21
          %s242 = smul.u32 %s241, %s22
          %s243 = ssub.s32 1, %s22
          %s244 = smul.u32 %s21, %s243
          %s245 = sadd.s32 %s242, %s244
          %s246 = smul.u32 4, %s245
        $region32: #{tpu_custom_call.1} parent=27 // pred_fallthru
          _
      $region28: #{tpu_custom_call.1} parent=5 // pred_fallthru
        _
      %p247 = scmp.le.s32.totalorder 1, %s14
      %p248 = scmp.lt.s32.totalorder %s14, 3
      %p249 = pnand %p247, %p248
      %p250 = pneg %p249
      // Predicated region
      $region33: #{tpu_custom_call.1} parent=5 // pred_check
        _
      $region34: #{tpu_custom_call.1} parent=5 // pred_check_branch
        %252 = sbr.rel (%p249) target = $region36
      $region35: #{tpu_custom_call.1} parent=5 // pred_region
        %s253 = ssub.s32 %s14, 1
        // Predicated region
        $region37: #{tpu_custom_call.1} parent=35 // pred_check
          %p254 = pneg %p114
        $region38: #{tpu_custom_call.1} parent=35 // pred_check_branch
          %256 = sbr.rel (%p254) target = $region40
        $region39: #{tpu_custom_call.1} parent=35 // pred_region
          %257 = dma.done [#allocation6], 8192
        $region40: #{tpu_custom_call.1} parent=35 // pred_fallthru
          _
        %s258 = ssub.s32 1, %s23
        %s259 = smul.u32 %s258, %s24
        %s260 = ssub.s32 1, %s24
        %s261 = smul.u32 %s23, %s260
        %s262 = sadd.s32 %s259, %s261
        %s263 = smul.u32 4, %s262
        %p264 = scmp.lt.s32.totalorder %s263, 7
        %s265 = scalar_select %p264, %s263, 7
        %s266 = smul.addr %s265, 8
        %s267 = scalar_lea.vmem %s0, %s266
        %p268 = pneg %p62
        %p269 = pneg %p59
        %p270 = scmp.lt.s32.totalorder %s23, 0
        %s271 = scalar_select %p270, %s23, 0
        %s272 = smul.addr %s271, 8
        %s273 = smul.addr %s272, 8
        %s274 = scalar_lea.vmem %s1, %s273
        %p275 = pneg %p88
        %p276 = pneg %p85
        %p277 = pneg %p114
        %p278 = pneg %p111
        %p279 = scmp.lt.s32.totalorder %s23, 0
        %s280 = scalar_select %p279, %s23, 0
        %s281 = smul.addr %s280, 4
        %s282 = scalar_lea.vmem %s3, %s281
        %p283 = pneg %p140
        %p284 = pneg %p137
        %p285 = pneg %p178
        %p286 = pneg %p175
        %s287 = sand.u32 %s165, 1
        %s288 = scalar_lea.sflag [#allocation7], %s287
        %s289 = sand.u32 %s165, 1
        %s290 = smul.addr %s289, 32
        %s291 = scalar_lea.vmem [#allocation8], %s290
        %s292 = ssub.s32 1, %s23
        %s293 = smul.u32 %s292, %s24
        %s294 = ssub.s32 1, %s24
        %s295 = smul.u32 %s23, %s294
        %s296 = sadd.s32 %s293, %s295
        %s297 = smul.u32 4, %s296
        %p298 = scmp.lt.s32.totalorder %s297, 7
        %s299 = scalar_select %p298, %s297, 7
        %s300 = smul.addr %s299, 8
        %s301 = scalar_lea.vmem %s0, %s300
        %s302 = ssub.s32 1, %s23
        %s303 = smul.u32 %s302, %s24
        %s304 = ssub.s32 1, %s24
        %s305 = smul.u32 %s23, %s304
        %s306 = sadd.s32 %s303, %s305
        %s307 = smul.u32 4, %s306
        %p308 = scmp.lt.s32.totalorder %s23, 0
        %s309 = scalar_select %p308, %s23, 0
        %s310 = smul.addr %s309, 8
        %s311 = smul.addr %s310, 8
        %s312 = scalar_lea.vmem %s1, %s311
        %p313 = scmp.lt.s32.totalorder %s23, 0
        %s314 = scalar_select %p313, %s23, 0
        %s315 = smul.addr %s314, 4
        %s316 = scalar_lea.vmem %s3, %s315
        %s317 = ssub.s32 1, %s23
        %s318 = smul.u32 %s317, %s24
        %s319 = ssub.s32 1, %s24
        %s320 = smul.u32 %s23, %s319
        %s321 = sadd.s32 %s318, %s320
        %s322 = smul.u32 4, %s321
        %s323 = ssub.s32 1, %s23
        %s324 = smul.u32 %s323, %s24
        %s325 = ssub.s32 1, %s24
        %s326 = smul.u32 %s23, %s325
        %s327 = sadd.s32 %s324, %s326
        %p328 = scmp.eq.s32.totalorder %s24, 0
        // Predicated region
        $region41: #{tpu_custom_call.1} parent=35 // pred_check
          %p329 = pneg %p328
        $region42: #{tpu_custom_call.1} parent=35 // pred_check_branch
          %331 = sbr.rel (%p329) target = $region44
        $region43: #{tpu_custom_call.1} parent=35 // pred_region
          %332 = vst [vmem:[#allocation3] sm:$0xff] 0.0
          %333 = vst [vmem:[#allocation4] sm:$0xff] 0.0
        $region44: #{tpu_custom_call.1} parent=35 // pred_fallthru
          _
        %v334 = vld [vmem:[%s301] sm:$0xff]
        %v335 = vld [vmem:[%s301 + $0x8] sm:$0xff]
        %v336 = vld [vmem:[%s301 + $0x10] sm:$0xff]
        %v337 = vld [vmem:[%s301 + $0x18] sm:$0xff]
        %v338 = vld [vmem:[%s312] sm:$0xff]
        %v339 = vld [vmem:[%s312 + $0x8] sm:$0xff]
        %v340 = vld [vmem:[%s312 + $0x10] sm:$0xff]
        %v341 = vld [vmem:[%s312 + $0x18] sm:$0xff]
        %v342 = vld [vmem:[%s312 + $0x20] sm:$0xff]
        %v343 = vld [vmem:[%s312 + $0x28] sm:$0xff]
        %v344 = vld [vmem:[%s312 + $0x30] sm:$0xff]
        %v345 = vld [vmem:[%s312 + $0x38] sm:$0xff]
        %v346 = vld [vmem:[%s316] sm:$0xf]
        %v348 = vlaneseq
        %v349 = vshrl.u32 %v348, 7
        %v350 = vsub.s32 0, %v349
        %v351 = vrot.slane %v346, %v350
        %v352 = vlaneseq
        %v353 = vshrl.u32 %v352, 7
        %v354 = vsub.s32 1, %v353
        %v355 = vrot.slane %v346, %v354
        %v356 = vlaneseq
        %v357 = vshrl.u32 %v356, 7
        %v358 = vsub.s32 2, %v357
        %v359 = vrot.slane %v346, %v358
        %v360 = vlaneseq
        %v361 = vshrl.u32 %v360, 7
        %v362 = vsub.s32 3, %v361
        %v363 = vrot.slane %v346, %v362
        %vm368 = vcmask 130048
        %v370 = vsel %vm368, %v334, 0
        %v373 = vsel %vm368, %v335, 0
        %v376 = vsel %vm368, %v336, 0
        %v379 = vsel %vm368, %v337, 0
        %381 = vmatprep.subr.mxu0 0.0
        %382 = vmatpush1.msra.mxu0 0.0
        %383 = vmatprep.subr.mxu0 0.0
        %384 = vmatpush1.msra.mxu0 0.0
        %385 = vmatprep.subr.mxu0 0.0
        %386 = vmatpush1.msra.mxu0 0.0
        %387 = vmatprep.subr.mxu0 0.0
        %388 = vmatpush1.msra.mxu0 0.0
        %389 = vmatprep.subr.mxu0 0.0
        %390 = vmatpush1.msra.mxu0 0.0
        %391 = vmatprep.subr.mxu0 0.0
        %392 = vmatpush1.msra.mxu0 0.0
        %393 = vmatprep.subr.mxu0 0.0
        %394 = vmatpush1.msra.mxu0 0.0
        %395 = vmatprep.subr.mxu0 0.0
        %396 = vmatpush1.msra.mxu0 0.0
        %397 = vmatprep.subr.mxu0 0.0
        %398 = vmatpush1.msra.mxu0 0.0
        %399 = vmatprep.subr.mxu0 0.0
        %400 = vmatpush1.msra.mxu0 0.0
        %401 = vmatprep.subr.mxu0 0.0
        %402 = vmatpush1.msra.mxu0 0.0
        %403 = vmatprep.subr.mxu0 0.0
        %404 = vmatpush1.msra.mxu0 0.0
        %405 = vmatprep.subr.mxu0 0.0
        %406 = vmatpush1.msra.mxu0 0.0
        %407 = vmatprep.subr.mxu0 0.0
        %408 = vmatpush1.msra.mxu0 0.0
        %409 = vmatprep.subr.mxu0 %v343
        %410 = vmatpush1.msra.mxu0 %v342
        %411 = vmatprep.subr.mxu0 %v339
        %412 = vmatpush1.msra.mxu0 %v338
        %413 = vmatprep.subr.mxu0 0.0
        %414 = vmatpush2.msra.mxu0 0.0
        %415 = vmatprep.subr.mxu0 0.0
        %416 = vmatpush2.msra.mxu0 0.0
        %417 = vmatprep.subr.mxu0 0.0
        %418 = vmatpush2.msra.mxu0 0.0
        %419 = vmatprep.subr.mxu0 0.0
        %420 = vmatpush2.msra.mxu0 0.0
        %421 = vmatprep.subr.mxu0 0.0
        %422 = vmatpush2.msra.mxu0 0.0
        %423 = vmatprep.subr.mxu0 0.0
        %424 = vmatpush2.msra.mxu0 0.0
        %425 = vmatprep.subr.mxu0 0.0
        %426 = vmatpush2.msra.mxu0 0.0
        %427 = vmatprep.subr.mxu0 0.0
        %428 = vmatpush2.msra.mxu0 0.0
        %429 = vmatprep.subr.mxu0 0.0
        %430 = vmatpush2.msra.mxu0 0.0
        %431 = vmatprep.subr.mxu0 0.0
        %432 = vmatpush2.msra.mxu0 0.0
        %433 = vmatprep.subr.mxu0 0.0
        %434 = vmatpush2.msra.mxu0 0.0
        %435 = vmatprep.subr.mxu0 0.0
        %436 = vmatpush2.msra.mxu0 0.0
        %437 = vmatprep.subr.mxu0 0.0
        %438 = vmatpush2.msra.mxu0 0.0
        %439 = vmatprep.subr.mxu0 0.0
        %440 = vmatpush2.msra.mxu0 0.0
        %441 = vmatprep.subr.mxu0 0.0
        %442 = vmatpush2.msra.mxu0 0.0
        %443 = vmatprep.subr.mxu0 0.0
        %444 = vmatpush2.msra.mxu0 0.0
        %445 = vmatprep.mubr.f32.mxu0 0.0
        %446 = vmatmul.mubr.f32.gmra.mxu0 %v370
        %v447 = vpop.f32.mrf.mxu0
        %v448 = vadd.f32 %v351, %v447
        %v449 = vpop.f32.mrf.mxu0
        %v450 = vadd.f32 %v355, %v449
        %451 = vmatprep.mubr.f32.mxu0 0.0
        %452 = vmatmul.mubr.f32.gmra.mxu0 %v373
        %v453 = vpop.f32.mrf.mxu0
        %v454 = vadd.f32 %v351, %v453
        %v455 = vpop.f32.mrf.mxu0
        %v456 = vadd.f32 %v355, %v455
        %457 = vmatprep.mubr.f32.mxu0 0.0
        %458 = vmatmul.mubr.f32.gmra.mxu0 %v376
        %v459 = vpop.f32.mrf.mxu0
        %v460 = vadd.f32 %v351, %v459
        %v461 = vpop.f32.mrf.mxu0
        %v462 = vadd.f32 %v355, %v461
        %463 = vmatprep.mubr.f32.mxu0 0.0
        %464 = vmatmul.mubr.f32.gmra.mxu0 %v379
        %v465 = vpop.f32.mrf.mxu0
        %v466 = vadd.f32 %v351, %v465
        %v467 = vpop.f32.mrf.mxu0
        %v468 = vadd.f32 %v355, %v467
        %469 = vdwg.mxu0
        %470 = vmatprep.subr.mxu0 0.0
        %471 = vmatpush1.msra.mxu0 0.0
        %472 = vmatprep.subr.mxu0 0.0
        %473 = vmatpush1.msra.mxu0 0.0
        %474 = vmatprep.subr.mxu0 0.0
        %475 = vmatpush1.msra.mxu0 0.0
        %476 = vmatprep.subr.mxu0 0.0
        %477 = vmatpush1.msra.mxu0 0.0
        %478 = vmatprep.subr.mxu0 0.0
        %479 = vmatpush1.msra.mxu0 0.0
        %480 = vmatprep.subr.mxu0 0.0
        %481 = vmatpush1.msra.mxu0 0.0
        %482 = vmatprep.subr.mxu0 0.0
        %483 = vmatpush1.msra.mxu0 0.0
        %484 = vmatprep.subr.mxu0 0.0
        %485 = vmatpush1.msra.mxu0 0.0
        %486 = vmatprep.subr.mxu0 0.0
        %487 = vmatpush1.msra.mxu0 0.0
        %488 = vmatprep.subr.mxu0 0.0
        %489 = vmatpush1.msra.mxu0 0.0
        %490 = vmatprep.subr.mxu0 0.0
        %491 = vmatpush1.msra.mxu0 0.0
        %492 = vmatprep.subr.mxu0 0.0
        %493 = vmatpush1.msra.mxu0 0.0
        %494 = vmatprep.subr.mxu0 0.0
        %495 = vmatpush1.msra.mxu0 0.0
        %496 = vmatprep.subr.mxu0 0.0
        %497 = vmatpush1.msra.mxu0 0.0
        %498 = vmatprep.subr.mxu0 %v345
        %499 = vmatpush1.msra.mxu0 %v344
        %500 = vmatprep.subr.mxu0 %v341
        %501 = vmatpush1.msra.mxu0 %v340
        %502 = vmatprep.subr.mxu0 0.0
        %503 = vmatpush2.msra.mxu0 0.0
        %504 = vmatprep.subr.mxu0 0.0
        %505 = vmatpush2.msra.mxu0 0.0
        %506 = vmatprep.subr.mxu0 0.0
        %507 = vmatpush2.msra.mxu0 0.0
        %508 = vmatprep.subr.mxu0 0.0
        %509 = vmatpush2.msra.mxu0 0.0
        %510 = vmatprep.subr.mxu0 0.0
        %511 = vmatpush2.msra.mxu0 0.0
        %512 = vmatprep.subr.mxu0 0.0
        %513 = vmatpush2.msra.mxu0 0.0
        %514 = vmatprep.subr.mxu0 0.0
        %515 = vmatpush2.msra.mxu0 0.0
        %516 = vmatprep.subr.mxu0 0.0
        %517 = vmatpush2.msra.mxu0 0.0
        %518 = vmatprep.subr.mxu0 0.0
        %519 = vmatpush2.msra.mxu0 0.0
        %520 = vmatprep.subr.mxu0 0.0
        %521 = vmatpush2.msra.mxu0 0.0
        %522 = vmatprep.subr.mxu0 0.0
        %523 = vmatpush2.msra.mxu0 0.0
        %524 = vmatprep.subr.mxu0 0.0
        %525 = vmatpush2.msra.mxu0 0.0
        %526 = vmatprep.subr.mxu0 0.0
        %527 = vmatpush2.msra.mxu0 0.0
        %528 = vmatprep.subr.mxu0 0.0
        %529 = vmatpush2.msra.mxu0 0.0
        %530 = vmatprep.subr.mxu0 0.0
        %531 = vmatpush2.msra.mxu0 0.0
        %532 = vmatprep.subr.mxu0 0.0
        %533 = vmatpush2.msra.mxu0 0.0
        %534 = vmatprep.mubr.f32.mxu0 0.0
        %535 = vmatmul.mubr.f32.gmra.mxu0 %v370
        %v536 = vpop.f32.mrf.mxu0
        %v537 = vadd.f32 %v359, %v536
        %v538 = vpop.f32.mrf.mxu0
        %v539 = vadd.f32 %v363, %v538
        %540 = vmatprep.mubr.f32.mxu0 0.0
        %541 = vmatmul.mubr.f32.gmra.mxu0 %v373
        %v542 = vpop.f32.mrf.mxu0
        %v543 = vadd.f32 %v359, %v542
        %v544 = vpop.f32.mrf.mxu0
        %v545 = vadd.f32 %v363, %v544
        %546 = vmatprep.mubr.f32.mxu0 0.0
        %547 = vmatmul.mubr.f32.gmra.mxu0 %v376
        %v548 = vpop.f32.mrf.mxu0
        %v549 = vadd.f32 %v359, %v548
        %v550 = vpop.f32.mrf.mxu0
        %v551 = vadd.f32 %v363, %v550
        %552 = vmatprep.mubr.f32.mxu0 0.0
        %553 = vmatmul.mubr.f32.gmra.mxu0 %v379
        %v554 = vpop.f32.mrf.mxu0
        %v555 = vadd.f32 %v359, %v554
        %v556 = vpop.f32.mrf.mxu0
        %v557 = vadd.f32 %v363, %v556
        %558 = vdwg.mxu0
        %559 = vst [vmem:[#allocation2] sm:$0xff] %v448
        %560 = vst [vmem:[#allocation2 + $0x8] sm:$0xff] %v450
        %561 = vst [vmem:[#allocation2 + $0x10] sm:$0xff] %v537
        %562 = vst [vmem:[#allocation2 + $0x18] sm:$0xff] %v539
        %563 = vst [vmem:[#allocation2 + $0x20] sm:$0xff] %v454
        %564 = vst [vmem:[#allocation2 + $0x28] sm:$0xff] %v456
        %565 = vst [vmem:[#allocation2 + $0x30] sm:$0xff] %v543
        %566 = vst [vmem:[#allocation2 + $0x38] sm:$0xff] %v545
        %567 = vst [vmem:[#allocation2 + $0x40] sm:$0xff] %v460
        %568 = vst [vmem:[#allocation2 + $0x48] sm:$0xff] %v462
        %569 = vst [vmem:[#allocation2 + $0x50] sm:$0xff] %v549
        %570 = vst [vmem:[#allocation2 + $0x58] sm:$0xff] %v551
        %571 = vst [vmem:[#allocation2 + $0x60] sm:$0xff] %v466
        %572 = vst [vmem:[#allocation2 + $0x68] sm:$0xff] %v468
        %573 = vst [vmem:[#allocation2 + $0x70] sm:$0xff] %v555
        %574 = vst [vmem:[#allocation2 + $0x78] sm:$0xff] %v557
        %s575 = smul.u32 %s23, 3
        %s576 = smul.u32 %s327, 4
        %s577 = sadd.s32 %s576, %s575
        %p578 = scmp.lt.s32.totalorder %s577, 8
        %s579 = smul.u32 %s23, 24
        %s580 = sshra.s32 %s579, 3
        %s581 = sand.u32 %s579, 7
        %s582 = smul.u32 %s580, 4
        %s583 = smul.addr %s582, 8
        %s584 = scalar_lea.vmem [#allocation2], %s583
        %v585 = vld [vmem:[%s584] sm:$0xff]
        %v586 = vld [vmem:[%s584 + $0x8] sm:$0xff]
        %v587 = vld [vmem:[%s584 + $0x10] sm:$0xff]
        %v588 = vld [vmem:[%s584 + $0x18] sm:$0xff]
        %v589 = vld [vmem:[#allocation3] sm:$0xff]
        %v590 = vld [vmem:[#allocation5] sm:$0xff]
        %v591 = vld [vmem:[#allocation5 + $0x8] sm:$0xff]
        %v592 = vld [vmem:[#allocation5 + $0x10] sm:$0xff]
        %v593 = vld [vmem:[#allocation5 + $0x18] sm:$0xff]
        %v594 = vld [vmem:[#allocation5 + $0x20] sm:$0xff]
        %v595 = vld [vmem:[#allocation5 + $0x28] sm:$0xff]
        %v596 = vld [vmem:[#allocation5 + $0x30] sm:$0xff]
        %v597 = vld [vmem:[#allocation5 + $0x38] sm:$0xff]
        %v598 = vld [vmem:[#allocation5 + $0x40] sm:$0xff]
        %v599 = vld [vmem:[#allocation5 + $0x48] sm:$0xff]
        %v600 = vld [vmem:[#allocation5 + $0x50] sm:$0xff]
        %v601 = vld [vmem:[#allocation5 + $0x58] sm:$0xff]
        %v602 = vld [vmem:[#allocation5 + $0x60] sm:$0xff]
        %v603 = vld [vmem:[#allocation5 + $0x68] sm:$0xff]
        %v604 = vld [vmem:[#allocation5 + $0x70] sm:$0xff]
        %v605 = vld [vmem:[#allocation5 + $0x78] sm:$0xff]
        %v606 = vld [vmem:[#allocation5 + $0x80] sm:$0xff]
        %v607 = vld [vmem:[#allocation5 + $0x88] sm:$0xff]
        %v608 = vld [vmem:[#allocation5 + $0x90] sm:$0xff]
        %v609 = vld [vmem:[#allocation5 + $0x98] sm:$0xff]
        %v610 = vld [vmem:[#allocation5 + $0xa0] sm:$0xff]
        %v611 = vld [vmem:[#allocation5 + $0xa8] sm:$0xff]
        %v612 = vld [vmem:[#allocation5 + $0xb0] sm:$0xff]
        %v613 = vld [vmem:[#allocation5 + $0xb8] sm:$0xff]
        %v614 = vld [vmem:[#allocation5 + $0xc0] sm:$0xff]
        %v615 = vld [vmem:[#allocation5 + $0xc8] sm:$0xff]
        %v616 = vld [vmem:[#allocation5 + $0xd0] sm:$0xff]
        %v617 = vld [vmem:[#allocation5 + $0xd8] sm:$0xff]
        %v618 = vld [vmem:[#allocation5 + $0xe0] sm:$0xff]
        %v619 = vld [vmem:[#allocation5 + $0xe8] sm:$0xff]
        %v620 = vld [vmem:[#allocation5 + $0xf0] sm:$0xff]
        %v621 = vld [vmem:[#allocation5 + $0xf8] sm:$0xff]
        %v622 = vld [vmem:[#allocation5 + $0x100] sm:$0xff]
        %v623 = vld [vmem:[#allocation5 + $0x108] sm:$0xff]
        %v624 = vld [vmem:[#allocation5 + $0x110] sm:$0xff]
        %v625 = vld [vmem:[#allocation5 + $0x118] sm:$0xff]
        %v626 = vld [vmem:[#allocation5 + $0x120] sm:$0xff]
        %v627 = vld [vmem:[#allocation5 + $0x128] sm:$0xff]
        %v628 = vld [vmem:[#allocation5 + $0x130] sm:$0xff]
        %v629 = vld [vmem:[#allocation5 + $0x138] sm:$0xff]
        %v630 = vld [vmem:[#allocation5 + $0x140] sm:$0xff]
        %v631 = vld [vmem:[#allocation5 + $0x148] sm:$0xff]
        %v632 = vld [vmem:[#allocation5 + $0x150] sm:$0xff]
        %v633 = vld [vmem:[#allocation5 + $0x158] sm:$0xff]
        %v634 = vld [vmem:[#allocation5 + $0x160] sm:$0xff]
        %v635 = vld [vmem:[#allocation5 + $0x168] sm:$0xff]
        %v636 = vld [vmem:[#allocation5 + $0x170] sm:$0xff]
        %v637 = vld [vmem:[#allocation5 + $0x178] sm:$0xff]
        %v638 = vld [vmem:[#allocation5 + $0x180] sm:$0xff]
        %v639 = vld [vmem:[#allocation5 + $0x188] sm:$0xff]
        %v640 = vld [vmem:[#allocation5 + $0x190] sm:$0xff]
        %v641 = vld [vmem:[#allocation5 + $0x198] sm:$0xff]
        %v642 = vld [vmem:[#allocation5 + $0x1a0] sm:$0xff]
        %v643 = vld [vmem:[#allocation5 + $0x1a8] sm:$0xff]
        %v644 = vld [vmem:[#allocation5 + $0x1b0] sm:$0xff]
        %v645 = vld [vmem:[#allocation5 + $0x1b8] sm:$0xff]
        %v646 = vld [vmem:[#allocation5 + $0x1c0] sm:$0xff]
        %v647 = vld [vmem:[#allocation5 + $0x1c8] sm:$0xff]
        %v648 = vld [vmem:[#allocation5 + $0x1d0] sm:$0xff]
        %v649 = vld [vmem:[#allocation5 + $0x1d8] sm:$0xff]
        %v650 = vld [vmem:[#allocation5 + $0x1e0] sm:$0xff]
        %v651 = vld [vmem:[#allocation5 + $0x1e8] sm:$0xff]
        %v652 = vld [vmem:[#allocation5 + $0x1f0] sm:$0xff]
        %v653 = vld [vmem:[#allocation5 + $0x1f8] sm:$0xff]
        %654 = vmatprep.subr.mxu0 %v651
        %655 = vmatpush1.msra.mxu0 %v650
        %656 = vmatprep.subr.mxu0 %v647
        %657 = vmatpush1.msra.mxu0 %v646
        %658 = vmatprep.subr.mxu0 %v643
        %659 = vmatpush1.msra.mxu0 %v642
        %660 = vmatprep.subr.mxu0 %v639
        %661 = vmatpush1.msra.mxu0 %v638
        %662 = vmatprep.subr.mxu0 %v635
        %663 = vmatpush1.msra.mxu0 %v634
        %664 = vmatprep.subr.mxu0 %v631
        %665 = vmatpush1.msra.mxu0 %v630
        %666 = vmatprep.subr.mxu0 %v627
        %667 = vmatpush1.msra.mxu0 %v626
        %668 = vmatprep.subr.mxu0 %v623
        %669 = vmatpush1.msra.mxu0 %v622
        %670 = vmatprep.subr.mxu0 %v619
        %671 = vmatpush1.msra.mxu0 %v618
        %672 = vmatprep.subr.mxu0 %v615
        %673 = vmatpush1.msra.mxu0 %v614
        %674 = vmatprep.subr.mxu0 %v611
        %675 = vmatpush1.msra.mxu0 %v610
        %676 = vmatprep.subr.mxu0 %v607
        %677 = vmatpush1.msra.mxu0 %v606
        %678 = vmatprep.subr.mxu0 %v603
        %679 = vmatpush1.msra.mxu0 %v602
        %680 = vmatprep.subr.mxu0 %v599
        %681 = vmatpush1.msra.mxu0 %v598
        %682 = vmatprep.subr.mxu0 %v595
        %683 = vmatpush1.msra.mxu0 %v594
        %684 = vmatprep.subr.mxu0 %v591
        %685 = vmatpush1.msra.mxu0 %v590
        %686 = vmatprep.subr.mxu0 0.0
        %687 = vmatpush2.msra.mxu0 0.0
        %688 = vmatprep.subr.mxu0 0.0
        %689 = vmatpush2.msra.mxu0 0.0
        %690 = vmatprep.subr.mxu0 0.0
        %691 = vmatpush2.msra.mxu0 0.0
        %692 = vmatprep.subr.mxu0 0.0
        %693 = vmatpush2.msra.mxu0 0.0
        %694 = vmatprep.subr.mxu0 0.0
        %695 = vmatpush2.msra.mxu0 0.0
        %696 = vmatprep.subr.mxu0 0.0
        %697 = vmatpush2.msra.mxu0 0.0
        %698 = vmatprep.subr.mxu0 0.0
        %699 = vmatpush2.msra.mxu0 0.0
        %700 = vmatprep.subr.mxu0 0.0
        %701 = vmatpush2.msra.mxu0 0.0
        %702 = vmatprep.subr.mxu0 0.0
        %703 = vmatpush2.msra.mxu0 0.0
        %704 = vmatprep.subr.mxu0 0.0
        %705 = vmatpush2.msra.mxu0 0.0
        %706 = vmatprep.subr.mxu0 0.0
        %707 = vmatpush2.msra.mxu0 0.0
        %708 = vmatprep.subr.mxu0 0.0
        %709 = vmatpush2.msra.mxu0 0.0
        %710 = vmatprep.subr.mxu0 0.0
        %711 = vmatpush2.msra.mxu0 0.0
        %712 = vmatprep.subr.mxu0 0.0
        %713 = vmatpush2.msra.mxu0 0.0
        %714 = vmatprep.subr.mxu0 0.0
        %715 = vmatpush2.msra.mxu0 0.0
        %716 = vmatprep.subr.mxu0 0.0
        %717 = vmatpush2.msra.mxu0 0.0
        %718 = vmatprep.mubr.f32.mxu0 0.0
        %719 = vmatmul.mubr.f32.gmra.mxu0 %v589
        %v720 = vpop.f32.mrf.mxu0
        %v721 = vadd.f32 0.0, %v720
        %v722 = vpop.f32.mrf.mxu0
        %v723 = vadd.f32 0.0, %v722
        %724 = vdwg.mxu0
        %725 = vmatprep.subr.mxu0 %v653
        %726 = vmatpush1.msra.mxu0 %v652
        %727 = vmatprep.subr.mxu0 %v649
        %728 = vmatpush1.msra.mxu0 %v648
        %729 = vmatprep.subr.mxu0 %v645
        %730 = vmatpush1.msra.mxu0 %v644
        %731 = vmatprep.subr.mxu0 %v641
        %732 = vmatpush1.msra.mxu0 %v640
        %733 = vmatprep.subr.mxu0 %v637
        %734 = vmatpush1.msra.mxu0 %v636
        %735 = vmatprep.subr.mxu0 %v633
        %736 = vmatpush1.msra.mxu0 %v632
        %737 = vmatprep.subr.mxu0 %v629
        %738 = vmatpush1.msra.mxu0 %v628
        %739 = vmatprep.subr.mxu0 %v625
        %740 = vmatpush1.msra.mxu0 %v624
        %741 = vmatprep.subr.mxu0 %v621
        %742 = vmatpush1.msra.mxu0 %v620
        %743 = vmatprep.subr.mxu0 %v617
        %744 = vmatpush1.msra.mxu0 %v616
        %745 = vmatprep.subr.mxu0 %v613
        %746 = vmatpush1.msra.mxu0 %v612
        %747 = vmatprep.subr.mxu0 %v609
        %748 = vmatpush1.msra.mxu0 %v608
        %749 = vmatprep.subr.mxu0 %v605
        %750 = vmatpush1.msra.mxu0 %v604
        %751 = vmatprep.subr.mxu0 %v601
        %752 = vmatpush1.msra.mxu0 %v600
        %753 = vmatprep.subr.mxu0 %v597
        %754 = vmatpush1.msra.mxu0 %v596
        %755 = vmatprep.subr.mxu0 %v593
        %756 = vmatpush1.msra.mxu0 %v592
        %757 = vmatprep.subr.mxu0 0.0
        %758 = vmatpush2.msra.mxu0 0.0
        %759 = vmatprep.subr.mxu0 0.0
        %760 = vmatpush2.msra.mxu0 0.0
        %761 = vmatprep.subr.mxu0 0.0
        %762 = vmatpush2.msra.mxu0 0.0
        %763 = vmatprep.subr.mxu0 0.0
        %764 = vmatpush2.msra.mxu0 0.0
        %765 = vmatprep.subr.mxu0 0.0
        %766 = vmatpush2.msra.mxu0 0.0
        %767 = vmatprep.subr.mxu0 0.0
        %768 = vmatpush2.msra.mxu0 0.0
        %769 = vmatprep.subr.mxu0 0.0
        %770 = vmatpush2.msra.mxu0 0.0
        %771 = vmatprep.subr.mxu0 0.0
        %772 = vmatpush2.msra.mxu0 0.0
        %773 = vmatprep.subr.mxu0 0.0
        %774 = vmatpush2.msra.mxu0 0.0
        %775 = vmatprep.subr.mxu0 0.0
        %776 = vmatpush2.msra.mxu0 0.0
        %777 = vmatprep.subr.mxu0 0.0
        %778 = vmatpush2.msra.mxu0 0.0
        %779 = vmatprep.subr.mxu0 0.0
        %780 = vmatpush2.msra.mxu0 0.0
        %781 = vmatprep.subr.mxu0 0.0
        %782 = vmatpush2.msra.mxu0 0.0
        %783 = vmatprep.subr.mxu0 0.0
        %784 = vmatpush2.msra.mxu0 0.0
        %785 = vmatprep.subr.mxu0 0.0
        %786 = vmatpush2.msra.mxu0 0.0
        %787 = vmatprep.subr.mxu0 0.0
        %788 = vmatpush2.msra.mxu0 0.0
        %789 = vmatprep.mubr.f32.mxu0 0.0
        %790 = vmatmul.mubr.f32.gmra.mxu0 %v589
        %v791 = vpop.f32.mrf.mxu0
        %v792 = vadd.f32 0.0, %v791
        %v793 = vpop.f32.mrf.mxu0
        %v794 = vadd.f32 0.0, %v793
        %795 = vdwg.mxu0
        %v796 = vadd.f32 %v585, %v721
        %v797 = vadd.f32 %v586, %v723
        %v798 = vadd.f32 %v587, %v792
        %v799 = vadd.f32 %v588, %v794
        %v800 = vxor.u32 %v796, 2147483648
        %v801 = vmul.f32 %v800, 1.442695
        %v802 = vpow.pop %v801
        %v803 = vadd.f32 %v802, 1.0
        %v804 = vrcp.pop %v803
        %v805 = vmul.f32 1.0, %v804
        %v806 = vxor.u32 %v797, 2147483648
        %v807 = vmul.f32 %v806, 1.442695
        %v808 = vpow.pop %v807
        %v809 = vadd.f32 %v808, 1.0
        %v810 = vrcp.pop %v809
        %v811 = vmul.f32 1.0, %v810
        %v812 = vtanh.pop %v798
        %v813 = vxor.u32 %v799, 2147483648
        %v814 = vmul.f32 %v813, 1.442695
        %v815 = vpow.pop %v814
        %v816 = vadd.f32 %v815, 1.0
        %v817 = vrcp.pop %v816
        %v818 = vmul.f32 1.0, %v817
        %v819 = vld [vmem:[#allocation4] sm:$0xff]
        %v820 = vmul.f32 %v811, %v819
        %v821 = vmul.f32 %v805, %v812
        %v822 = vadd.f32 %v820, %v821
        %v823 = vtanh.pop %v822
        %v824 = vmul.f32 %v818, %v823
        %s825 = scalar_select %p578, 1, 0
        %v826 = vstv %s825
        %vm827 = vcmp.eq.s32.totalorder %v826, 1
        %v828 = vsel %vm827, %v822, %v819
        %v829 = vsel %vm827, %v824, %v589
        %830 = vst [vmem:[#allocation4] sm:$0xff] %v828
        %831 = vst [vmem:[#allocation3] sm:$0xff] %v829
        %s832 = scalar_lea.vmem %s291, %s579 [#allocation8]
        %833 = vst [vmem:[%s832] sm:$0xff] %v829
        %s834 = smul.u32 %s23, 2
        %s835 = sadd.s32 %s323, %s834
        %s836 = sadd.s32 %s576, %s835
        %p837 = scmp.lt.s32.totalorder %s836, 8
        %s838 = smul.u32 %s835, 8
        %s839 = sshra.s32 %s838, 3
        %s840 = sand.u32 %s838, 7
        %s841 = smul.u32 %s839, 4
        %s842 = smul.addr %s841, 8
        %s843 = scalar_lea.vmem [#allocation2], %s842
        %v844 = vld [vmem:[%s843] sm:$0xff]
        %v845 = vld [vmem:[%s843 + $0x8] sm:$0xff]
        %v846 = vld [vmem:[%s843 + $0x10] sm:$0xff]
        %v847 = vld [vmem:[%s843 + $0x18] sm:$0xff]
        %v848 = vld [vmem:[#allocation3] sm:$0xff]
        %v849 = vld [vmem:[#allocation5] sm:$0xff]
        %v850 = vld [vmem:[#allocation5 + $0x8] sm:$0xff]
        %v851 = vld [vmem:[#allocation5 + $0x10] sm:$0xff]
        %v852 = vld [vmem:[#allocation5 + $0x18] sm:$0xff]
        %v853 = vld [vmem:[#allocation5 + $0x20] sm:$0xff]
        %v854 = vld [vmem:[#allocation5 + $0x28] sm:$0xff]
        %v855 = vld [vmem:[#allocation5 + $0x30] sm:$0xff]
        %v856 = vld [vmem:[#allocation5 + $0x38] sm:$0xff]
        %v857 = vld [vmem:[#allocation5 + $0x40] sm:$0xff]
        %v858 = vld [vmem:[#allocation5 + $0x48] sm:$0xff]
        %v859 = vld [vmem:[#allocation5 + $0x50] sm:$0xff]
        %v860 = vld [vmem:[#allocation5 + $0x58] sm:$0xff]
        %v861 = vld [vmem:[#allocation5 + $0x60] sm:$0xff]
        %v862 = vld [vmem:[#allocation5 + $0x68] sm:$0xff]
        %v863 = vld [vmem:[#allocation5 + $0x70] sm:$0xff]
        %v864 = vld [vmem:[#allocation5 + $0x78] sm:$0xff]
        %v865 = vld [vmem:[#allocation5 + $0x80] sm:$0xff]
        %v866 = vld [vmem:[#allocation5 + $0x88] sm:$0xff]
        %v867 = vld [vmem:[#allocation5 + $0x90] sm:$0xff]
        %v868 = vld [vmem:[#allocation5 + $0x98] sm:$0xff]
        %v869 = vld [vmem:[#allocation5 + $0xa0] sm:$0xff]
        %v870 = vld [vmem:[#allocation5 + $0xa8] sm:$0xff]
        %v871 = vld [vmem:[#allocation5 + $0xb0] sm:$0xff]
        %v872 = vld [vmem:[#allocation5 + $0xb8] sm:$0xff]
        %v873 = vld [vmem:[#allocation5 + $0xc0] sm:$0xff]
        %v874 = vld [vmem:[#allocation5 + $0xc8] sm:$0xff]
        %v875 = vld [vmem:[#allocation5 + $0xd0] sm:$0xff]
        %v876 = vld [vmem:[#allocation5 + $0xd8] sm:$0xff]
        %v877 = vld [vmem:[#allocation5 + $0xe0] sm:$0xff]
        %v878 = vld [vmem:[#allocation5 + $0xe8] sm:$0xff]
        %v879 = vld [vmem:[#allocation5 + $0xf0] sm:$0xff]
        %v880 = vld [vmem:[#allocation5 + $0xf8] sm:$0xff]
        %v881 = vld [vmem:[#allocation5 + $0x100] sm:$0xff]
        %v882 = vld [vmem:[#allocation5 + $0x108] sm:$0xff]
        %v883 = vld [vmem:[#allocation5 + $0x110] sm:$0xff]
        %v884 = vld [vmem:[#allocation5 + $0x118] sm:$0xff]
        %v885 = vld [vmem:[#allocation5 + $0x120] sm:$0xff]
        %v886 = vld [vmem:[#allocation5 + $0x128] sm:$0xff]
        %v887 = vld [vmem:[#allocation5 + $0x130] sm:$0xff]
        %v888 = vld [vmem:[#allocation5 + $0x138] sm:$0xff]
        %v889 = vld [vmem:[#allocation5 + $0x140] sm:$0xff]
        %v890 = vld [vmem:[#allocation5 + $0x148] sm:$0xff]
        %v891 = vld [vmem:[#allocation5 + $0x150] sm:$0xff]
        %v892 = vld [vmem:[#allocation5 + $0x158] sm:$0xff]
        %v893 = vld [vmem:[#allocation5 + $0x160] sm:$0xff]
        %v894 = vld [vmem:[#allocation5 + $0x168] sm:$0xff]
        %v895 = vld [vmem:[#allocation5 + $0x170] sm:$0xff]
        %v896 = vld [vmem:[#allocation5 + $0x178] sm:$0xff]
        %v897 = vld [vmem:[#allocation5 + $0x180] sm:$0xff]
        %v898 = vld [vmem:[#allocation5 + $0x188] sm:$0xff]
        %v899 = vld [vmem:[#allocation5 + $0x190] sm:$0xff]
        %v900 = vld [vmem:[#allocation5 + $0x198] sm:$0xff]
        %v901 = vld [vmem:[#allocation5 + $0x1a0] sm:$0xff]
        %v902 = vld [vmem:[#allocation5 + $0x1a8] sm:$0xff]
        %v903 = vld [vmem:[#allocation5 + $0x1b0] sm:$0xff]
        %v904 = vld [vmem:[#allocation5 + $0x1b8] sm:$0xff]
        %v905 = vld [vmem:[#allocation5 + $0x1c0] sm:$0xff]
        %v906 = vld [vmem:[#allocation5 + $0x1c8] sm:$0xff]
        %v907 = vld [vmem:[#allocation5 + $0x1d0] sm:$0xff]
        %v908 = vld [vmem:[#allocation5 + $0x1d8] sm:$0xff]
        %v909 = vld [vmem:[#allocation5 + $0x1e0] sm:$0xff]
        %v910 = vld [vmem:[#allocation5 + $0x1e8] sm:$0xff]
        %v911 = vld [vmem:[#allocation5 + $0x1f0] sm:$0xff]
        %v912 = vld [vmem:[#allocation5 + $0x1f8] sm:$0xff]
        %913 = vmatprep.subr.mxu0 %v910
        %914 = vmatpush1.msra.mxu0 %v909
        %915 = vmatprep.subr.mxu0 %v906
        %916 = vmatpush1.msra.mxu0 %v905
        %917 = vmatprep.subr.mxu0 %v902
        %918 = vmatpush1.msra.mxu0 %v901
        %919 = vmatprep.subr.mxu0 %v898
        %920 = vmatpush1.msra.mxu0 %v897
        %921 = vmatprep.subr.mxu0 %v894
        %922 = vmatpush1.msra.mxu0 %v893
        %923 = vmatprep.subr.mxu0 %v890
        %924 = vmatpush1.msra.mxu0 %v889
        %925 = vmatprep.subr.mxu0 %v886
        %926 = vmatpush1.msra.mxu0 %v885
        %927 = vmatprep.subr.mxu0 %v882
        %928 = vmatpush1.msra.mxu0 %v881
        %929 = vmatprep.subr.mxu0 %v878
        %930 = vmatpush1.msra.mxu0 %v877
        %931 = vmatprep.subr.mxu0 %v874
        %932 = vmatpush1.msra.mxu0 %v873
        %933 = vmatprep.subr.mxu0 %v870
        %934 = vmatpush1.msra.mxu0 %v869
        %935 = vmatprep.subr.mxu0 %v866
        %936 = vmatpush1.msra.mxu0 %v865
        %937 = vmatprep.subr.mxu0 %v862
        %938 = vmatpush1.msra.mxu0 %v861
        %939 = vmatprep.subr.mxu0 %v858
        %940 = vmatpush1.msra.mxu0 %v857
        %941 = vmatprep.subr.mxu0 %v854
        %942 = vmatpush1.msra.mxu0 %v853
        %943 = vmatprep.subr.mxu0 %v850
        %944 = vmatpush1.msra.mxu0 %v849
        %945 = vmatprep.subr.mxu0 0.0
        %946 = vmatpush2.msra.mxu0 0.0
        %947 = vmatprep.subr.mxu0 0.0
        %948 = vmatpush2.msra.mxu0 0.0
        %949 = vmatprep.subr.mxu0 0.0
        %950 = vmatpush2.msra.mxu0 0.0
        %951 = vmatprep.subr.mxu0 0.0
        %952 = vmatpush2.msra.mxu0 0.0
        %953 = vmatprep.subr.mxu0 0.0
        %954 = vmatpush2.msra.mxu0 0.0
        %955 = vmatprep.subr.mxu0 0.0
        %956 = vmatpush2.msra.mxu0 0.0
        %957 = vmatprep.subr.mxu0 0.0
        %958 = vmatpush2.msra.mxu0 0.0
        %959 = vmatprep.subr.mxu0 0.0
        %960 = vmatpush2.msra.mxu0 0.0
        %961 = vmatprep.subr.mxu0 0.0
        %962 = vmatpush2.msra.mxu0 0.0
        %963 = vmatprep.subr.mxu0 0.0
        %964 = vmatpush2.msra.mxu0 0.0
        %965 = vmatprep.subr.mxu0 0.0
        %966 = vmatpush2.msra.mxu0 0.0
        %967 = vmatprep.subr.mxu0 0.0
        %968 = vmatpush2.msra.mxu0 0.0
        %969 = vmatprep.subr.mxu0 0.0
        %970 = vmatpush2.msra.mxu0 0.0
        %971 = vmatprep.subr.mxu0 0.0
        %972 = vmatpush2.msra.mxu0 0.0
        %973 = vmatprep.subr.mxu0 0.0
        %974 = vmatpush2.msra.mxu0 0.0
        %975 = vmatprep.subr.mxu0 0.0
        %976 = vmatpush2.msra.mxu0 0.0
        %977 = vmatprep.mubr.f32.mxu0 0.0
        %978 = vmatmul.mubr.f32.gmra.mxu0 %v848
        %v979 = vpop.f32.mrf.mxu0
        %v980 = vadd.f32 0.0, %v979
        %v981 = vpop.f32.mrf.mxu0
        %v982 = vadd.f32 0.0, %v981
        %983 = vdwg.mxu0
        %984 = vmatprep.subr.mxu0 %v912
        %985 = vmatpush1.msra.mxu0 %v911
        %986 = vmatprep.subr.mxu0 %v908
        %987 = vmatpush1.msra.mxu0 %v907
        %988 = vmatprep.subr.mxu0 %v904
        %989 = vmatpush1.msra.mxu0 %v903
        %990 = vmatprep.subr.mxu0 %v900
        %991 = vmatpush1.msra.mxu0 %v899
        %992 = vmatprep.subr.mxu0 %v896
        %993 = vmatpush1.msra.mxu0 %v895
        %994 = vmatprep.subr.mxu0 %v892
        %995 = vmatpush1.msra.mxu0 %v891
        %996 = vmatprep.subr.mxu0 %v888
        %997 = vmatpush1.msra.mxu0 %v887
        %998 = vmatprep.subr.mxu0 %v884
        %999 = vmatpush1.msra.mxu0 %v883
        %1000 = vmatprep.subr.mxu0 %v880
        %1001 = vmatpush1.msra.mxu0 %v879
        %1002 = vmatprep.subr.mxu0 %v876
        %1003 = vmatpush1.msra.mxu0 %v875
        %1004 = vmatprep.subr.mxu0 %v872
        %1005 = vmatpush1.msra.mxu0 %v871
        %1006 = vmatprep.subr.mxu0 %v868
        %1007 = vmatpush1.msra.mxu0 %v867
        %1008 = vmatprep.subr.mxu0 %v864
        %1009 = vmatpush1.msra.mxu0 %v863
        %1010 = vmatprep.subr.mxu0 %v860
        %1011 = vmatpush1.msra.mxu0 %v859
        %1012 = vmatprep.subr.mxu0 %v856
        %1013 = vmatpush1.msra.mxu0 %v855
        %1014 = vmatprep.subr.mxu0 %v852
        %1015 = vmatpush1.msra.mxu0 %v851
        %1016 = vmatprep.subr.mxu0 0.0
        %1017 = vmatpush2.msra.mxu0 0.0
        %1018 = vmatprep.subr.mxu0 0.0
        %1019 = vmatpush2.msra.mxu0 0.0
        %1020 = vmatprep.subr.mxu0 0.0
        %1021 = vmatpush2.msra.mxu0 0.0
        %1022 = vmatprep.subr.mxu0 0.0
        %1023 = vmatpush2.msra.mxu0 0.0
        %1024 = vmatprep.subr.mxu0 0.0
        %1025 = vmatpush2.msra.mxu0 0.0
        %1026 = vmatprep.subr.mxu0 0.0
        %1027 = vmatpush2.msra.mxu0 0.0
        %1028 = vmatprep.subr.mxu0 0.0
        %1029 = vmatpush2.msra.mxu0 0.0
        %1030 = vmatprep.subr.mxu0 0.0
        %1031 = vmatpush2.msra.mxu0 0.0
        %1032 = vmatprep.subr.mxu0 0.0
        %1033 = vmatpush2.msra.mxu0 0.0
        %1034 = vmatprep.subr.mxu0 0.0
        %1035 = vmatpush2.msra.mxu0 0.0
        %1036 = vmatprep.subr.mxu0 0.0
        %1037 = vmatpush2.msra.mxu0 0.0
        %1038 = vmatprep.subr.mxu0 0.0
        %1039 = vmatpush2.msra.mxu0 0.0
        %1040 = vmatprep.subr.mxu0 0.0
        %1041 = vmatpush2.msra.mxu0 0.0
        %1042 = vmatprep.subr.mxu0 0.0
        %1043 = vmatpush2.msra.mxu0 0.0
        %1044 = vmatprep.subr.mxu0 0.0
        %1045 = vmatpush2.msra.mxu0 0.0
        %1046 = vmatprep.subr.mxu0 0.0
        %1047 = vmatpush2.msra.mxu0 0.0
        %1048 = vmatprep.mubr.f32.mxu0 0.0
        %1049 = vmatmul.mubr.f32.gmra.mxu0 %v848
        %v1050 = vpop.f32.mrf.mxu0
        %v1051 = vadd.f32 0.0, %v1050
        %v1052 = vpop.f32.mrf.mxu0
        %v1053 = vadd.f32 0.0, %v1052
        %1054 = vdwg.mxu0
        %v1055 = vadd.f32 %v844, %v980
        %v1056 = vadd.f32 %v845, %v982
        %v1057 = vadd.f32 %v846, %v1051
        %v1058 = vadd.f32 %v847, %v1053
        %v1059 = vxor.u32 %v1055, 2147483648
        %v1060 = vmul.f32 %v1059, 1.442695
        %v1061 = vpow.pop %v1060
        %v1062 = vadd.f32 %v1061, 1.0
        %v1063 = vrcp.pop %v1062
        %v1064 = vmul.f32 1.0, %v1063
        %v1065 = vxor.u32 %v1056, 2147483648
        %v1066 = vmul.f32 %v1065, 1.442695
        %v1067 = vpow.pop %v1066
        %v1068 = vadd.f32 %v1067, 1.0
        %v1069 = vrcp.pop %v1068
        %v1070 = vmul.f32 1.0, %v1069
        %v1071 = vtanh.pop %v1057
        %v1072 = vxor.u32 %v1058, 2147483648
        %v1073 = vmul.f32 %v1072, 1.442695
        %v1074 = vpow.pop %v1073
        %v1075 = vadd.f32 %v1074, 1.0
        %v1076 = vrcp.pop %v1075
        %v1077 = vmul.f32 1.0, %v1076
        %v1078 = vld [vmem:[#allocation4] sm:$0xff]
        %v1079 = vmul.f32 %v1070, %v1078
        %v1080 = vmul.f32 %v1064, %v1071
        %v1081 = vadd.f32 %v1079, %v1080
        %v1082 = vtanh.pop %v1081
        %v1083 = vmul.f32 %v1077, %v1082
        %s1084 = scalar_select %p837, 1, 0
        %v1085 = vstv %s1084
        %vm1086 = vcmp.eq.s32.totalorder %v1085, 1
        %v1087 = vsel %vm1086, %v1081, %v1078
        %v1088 = vsel %vm1086, %v1083, %v848
        %1089 = vst [vmem:[#allocation4] sm:$0xff] %v1087
        %1090 = vst [vmem:[#allocation3] sm:$0xff] %v1088
        %s1091 = scalar_lea.vmem %s291, %s838 [#allocation8]
        %1092 = vst [vmem:[%s1091] sm:$0xff] %v1088
        %s1093 = smul.u32 %s323, 2
        %s1094 = sadd.s32 %s1093, %s23
        %s1095 = sadd.s32 %s576, %s1094
        %p1096 = scmp.lt.s32.totalorder %s1095, 8
        %s1097 = smul.u32 %s1094, 8
        %s1098 = sshra.s32 %s1097, 3
        %s1099 = sand.u32 %s1097, 7
        %s1100 = smul.u32 %s1098, 4
        %s1101 = smul.addr %s1100, 8
        %s1102 = scalar_lea.vmem [#allocation2], %s1101
        %v1103 = vld [vmem:[%s1102] sm:$0xff]
        %v1104 = vld [vmem:[%s1102 + $0x8] sm:$0xff]
        %v1105 = vld [vmem:[%s1102 + $0x10] sm:$0xff]
        %v1106 = vld [vmem:[%s1102 + $0x18] sm:$0xff]
        %v1107 = vld [vmem:[#allocation3] sm:$0xff]
        %v1108 = vld [vmem:[#allocation5] sm:$0xff]
        %v1109 = vld [vmem:[#allocation5 + $0x8] sm:$0xff]
        %v1110 = vld [vmem:[#allocation5 + $0x10] sm:$0xff]
        %v1111 = vld [vmem:[#allocation5 + $0x18] sm:$0xff]
        %v1112 = vld [vmem:[#allocation5 + $0x20] sm:$0xff]
        %v1113 = vld [vmem:[#allocation5 + $0x28] sm:$0xff]
        %v1114 = vld [vmem:[#allocation5 + $0x30] sm:$0xff]
        %v1115 = vld [vmem:[#allocation5 + $0x38] sm:$0xff]
        %v1116 = vld [vmem:[#allocation5 + $0x40] sm:$0xff]
        %v1117 = vld [vmem:[#allocation5 + $0x48] sm:$0xff]
        %v1118 = vld [vmem:[#allocation5 + $0x50] sm:$0xff]
        %v1119 = vld [vmem:[#allocation5 + $0x58] sm:$0xff]
        %v1120 = vld [vmem:[#allocation5 + $0x60] sm:$0xff]
        %v1121 = vld [vmem:[#allocation5 + $0x68] sm:$0xff]
        %v1122 = vld [vmem:[#allocation5 + $0x70] sm:$0xff]
        %v1123 = vld [vmem:[#allocation5 + $0x78] sm:$0xff]
        %v1124 = vld [vmem:[#allocation5 + $0x80] sm:$0xff]
        %v1125 = vld [vmem:[#allocation5 + $0x88] sm:$0xff]
        %v1126 = vld [vmem:[#allocation5 + $0x90] sm:$0xff]
        %v1127 = vld [vmem:[#allocation5 + $0x98] sm:$0xff]
        %v1128 = vld [vmem:[#allocation5 + $0xa0] sm:$0xff]
        %v1129 = vld [vmem:[#allocation5 + $0xa8] sm:$0xff]
        %v1130 = vld [vmem:[#allocation5 + $0xb0] sm:$0xff]
        %v1131 = vld [vmem:[#allocation5 + $0xb8] sm:$0xff]
        %v1132 = vld [vmem:[#allocation5 + $0xc0] sm:$0xff]
        %v1133 = vld [vmem:[#allocation5 + $0xc8] sm:$0xff]
        %v1134 = vld [vmem:[#allocation5 + $0xd0] sm:$0xff]
        %v1135 = vld [vmem:[#allocation5 + $0xd8] sm:$0xff]
        %v1136 = vld [vmem:[#allocation5 + $0xe0] sm:$0xff]
        %v1137 = vld [vmem:[#allocation5 + $0xe8] sm:$0xff]
        %v1138 = vld [vmem:[#allocation5 + $0xf0] sm:$0xff]
        %v1139 = vld [vmem:[#allocation5 + $0xf8] sm:$0xff]
        %v1140 = vld [vmem:[#allocation5 + $0x100] sm:$0xff]
        %v1141 = vld [vmem:[#allocation5 + $0x108] sm:$0xff]
        %v1142 = vld [vmem:[#allocation5 + $0x110] sm:$0xff]
        %v1143 = vld [vmem:[#allocation5 + $0x118] sm:$0xff]
        %v1144 = vld [vmem:[#allocation5 + $0x120] sm:$0xff]
        %v1145 = vld [vmem:[#allocation5 + $0x128] sm:$0xff]
        %v1146 = vld [vmem:[#allocation5 + $0x130] sm:$0xff]
        %v1147 = vld [vmem:[#allocation5 + $0x138] sm:$0xff]
        %v1148 = vld [vmem:[#allocation5 + $0x140] sm:$0xff]
        %v1149 = vld [vmem:[#allocation5 + $0x148] sm:$0xff]
        %v1150 = vld [vmem:[#allocation5 + $0x150] sm:$0xff]
        %v1151 = vld [vmem:[#allocation5 + $0x158] sm:$0xff]
        %v1152 = vld [vmem:[#allocation5 + $0x160] sm:$0xff]
        %v1153 = vld [vmem:[#allocation5 + $0x168] sm:$0xff]
        %v1154 = vld [vmem:[#allocation5 + $0x170] sm:$0xff]
        %v1155 = vld [vmem:[#allocation5 + $0x178] sm:$0xff]
        %v1156 = vld [vmem:[#allocation5 + $0x180] sm:$0xff]
        %v1157 = vld [vmem:[#allocation5 + $0x188] sm:$0xff]
        %v1158 = vld [vmem:[#allocation5 + $0x190] sm:$0xff]
        %v1159 = vld [vmem:[#allocation5 + $0x198] sm:$0xff]
        %v1160 = vld [vmem:[#allocation5 + $0x1a0] sm:$0xff]
        %v1161 = vld [vmem:[#allocation5 + $0x1a8] sm:$0xff]
        %v1162 = vld [vmem:[#allocation5 + $0x1b0] sm:$0xff]
        %v1163 = vld [vmem:[#allocation5 + $0x1b8] sm:$0xff]
        %v1164 = vld [vmem:[#allocation5 + $0x1c0] sm:$0xff]
        %v1165 = vld [vmem:[#allocation5 + $0x1c8] sm:$0xff]
        %v1166 = vld [vmem:[#allocation5 + $0x1d0] sm:$0xff]
        %v1167 = vld [vmem:[#allocation5 + $0x1d8] sm:$0xff]
        %v1168 = vld [vmem:[#allocation5 + $0x1e0] sm:$0xff]
        %v1169 = vld [vmem:[#allocation5 + $0x1e8] sm:$0xff]
        %v1170 = vld [vmem:[#allocation5 + $0x1f0] sm:$0xff]
        %v1171 = vld [vmem:[#allocation5 + $0x1f8] sm:$0xff]
        %1172 = vmatprep.subr.mxu0 %v1169
        %1173 = vmatpush1.msra.mxu0 %v1168
        %1174 = vmatprep.subr.mxu0 %v1165
        %1175 = vmatpush1.msra.mxu0 %v1164
        %1176 = vmatprep.subr.mxu0 %v1161
        %1177 = vmatpush1.msra.mxu0 %v1160
        %1178 = vmatprep.subr.mxu0 %v1157
        %1179 = vmatpush1.msra.mxu0 %v1156
        %1180 = vmatprep.subr.mxu0 %v1153
        %1181 = vmatpush1.msra.mxu0 %v1152
        %1182 = vmatprep.subr.mxu0 %v1149
        %1183 = vmatpush1.msra.mxu0 %v1148
        %1184 = vmatprep.subr.mxu0 %v1145
        %1185 = vmatpush1.msra.mxu0 %v1144
        %1186 = vmatprep.subr.mxu0 %v1141
        %1187 = vmatpush1.msra.mxu0 %v1140
        %1188 = vmatprep.subr.mxu0 %v1137
        %1189 = vmatpush1.msra.mxu0 %v1136
        %1190 = vmatprep.subr.mxu0 %v1133
        %1191 = vmatpush1.msra.mxu0 %v1132
        %1192 = vmatprep.subr.mxu0 %v1129
        %1193 = vmatpush1.msra.mxu0 %v1128
        %1194 = vmatprep.subr.mxu0 %v1125
        %1195 = vmatpush1.msra.mxu0 %v1124
        %1196 = vmatprep.subr.mxu0 %v1121
        %1197 = vmatpush1.msra.mxu0 %v1120
        %1198 = vmatprep.subr.mxu0 %v1117
        %1199 = vmatpush1.msra.mxu0 %v1116
        %1200 = vmatprep.subr.mxu0 %v1113
        %1201 = vmatpush1.msra.mxu0 %v1112
        %1202 = vmatprep.subr.mxu0 %v1109
        %1203 = vmatpush1.msra.mxu0 %v1108
        %1204 = vmatprep.subr.mxu0 0.0
        %1205 = vmatpush2.msra.mxu0 0.0
        %1206 = vmatprep.subr.mxu0 0.0
        %1207 = vmatpush2.msra.mxu0 0.0
        %1208 = vmatprep.subr.mxu0 0.0
        %1209 = vmatpush2.msra.mxu0 0.0
        %1210 = vmatprep.subr.mxu0 0.0
        %1211 = vmatpush2.msra.mxu0 0.0
        %1212 = vmatprep.subr.mxu0 0.0
        %1213 = vmatpush2.msra.mxu0 0.0
        %1214 = vmatprep.subr.mxu0 0.0
        %1215 = vmatpush2.msra.mxu0 0.0
        %1216 = vmatprep.subr.mxu0 0.0
        %1217 = vmatpush2.msra.mxu0 0.0
        %1218 = vmatprep.subr.mxu0 0.0
        %1219 = vmatpush2.msra.mxu0 0.0
        %1220 = vmatprep.subr.mxu0 0.0
        %1221 = vmatpush2.msra.mxu0 0.0
        %1222 = vmatprep.subr.mxu0 0.0
        %1223 = vmatpush2.msra.mxu0 0.0
        %1224 = vmatprep.subr.mxu0 0.0
        %1225 = vmatpush2.msra.mxu0 0.0
        %1226 = vmatprep.subr.mxu0 0.0
        %1227 = vmatpush2.msra.mxu0 0.0
        %1228 = vmatprep.subr.mxu0 0.0
        %1229 = vmatpush2.msra.mxu0 0.0
        %1230 = vmatprep.subr.mxu0 0.0
        %1231 = vmatpush2.msra.mxu0 0.0
        %1232 = vmatprep.subr.mxu0 0.0
        %1233 = vmatpush2.msra.mxu0 0.0
        %1234 = vmatprep.subr.mxu0 0.0
        %1235 = vmatpush2.msra.mxu0 0.0
        %1236 = vmatprep.mubr.f32.mxu0 0.0
        %1237 = vmatmul.mubr.f32.gmra.mxu0 %v1107
        %v1238 = vpop.f32.mrf.mxu0
        %v1239 = vadd.f32 0.0, %v1238
        %v1240 = vpop.f32.mrf.mxu0
        %v1241 = vadd.f32 0.0, %v1240
        %1242 = vdwg.mxu0
        %1243 = vmatprep.subr.mxu0 %v1171
        %1244 = vmatpush1.msra.mxu0 %v1170
        %1245 = vmatprep.subr.mxu0 %v1167
        %1246 = vmatpush1.msra.mxu0 %v1166
        %1247 = vmatprep.subr.mxu0 %v1163
        %1248 = vmatpush1.msra.mxu0 %v1162
        %1249 = vmatprep.subr.mxu0 %v1159
        %1250 = vmatpush1.msra.mxu0 %v1158
        %1251 = vmatprep.subr.mxu0 %v1155
        %1252 = vmatpush1.msra.mxu0 %v1154
        %1253 = vmatprep.subr.mxu0 %v1151
        %1254 = vmatpush1.msra.mxu0 %v1150
        %1255 = vmatprep.subr.mxu0 %v1147
        %1256 = vmatpush1.msra.mxu0 %v1146
        %1257 = vmatprep.subr.mxu0 %v1143
        %1258 = vmatpush1.msra.mxu0 %v1142
        %1259 = vmatprep.subr.mxu0 %v1139
        %1260 = vmatpush1.msra.mxu0 %v1138
        %1261 = vmatprep.subr.mxu0 %v1135
        %1262 = vmatpush1.msra.mxu0 %v1134
        %1263 = vmatprep.subr.mxu0 %v1131
        %1264 = vmatpush1.msra.mxu0 %v1130
        %1265 = vmatprep.subr.mxu0 %v1127
        %1266 = vmatpush1.msra.mxu0 %v1126
        %1267 = vmatprep.subr.mxu0 %v1123
        %1268 = vmatpush1.msra.mxu0 %v1122
        %1269 = vmatprep.subr.mxu0 %v1119
        %1270 = vmatpush1.msra.mxu0 %v1118
        %1271 = vmatprep.subr.mxu0 %v1115
        %1272 = vmatpush1.msra.mxu0 %v1114
        %1273 = vmatprep.subr.mxu0 %v1111
        %1274 = vmatpush1.msra.mxu0 %v1110
        %1275 = vmatprep.subr.mxu0 0.0
        %1276 = vmatpush2.msra.mxu0 0.0
        %1277 = vmatprep.subr.mxu0 0.0
        %1278 = vmatpush2.msra.mxu0 0.0
        %1279 = vmatprep.subr.mxu0 0.0
        %1280 = vmatpush2.msra.mxu0 0.0
        %1281 = vmatprep.subr.mxu0 0.0
        %1282 = vmatpush2.msra.mxu0 0.0
        %1283 = vmatprep.subr.mxu0 0.0
        %1284 = vmatpush2.msra.mxu0 0.0
        %1285 = vmatprep.subr.mxu0 0.0
        %1286 = vmatpush2.msra.mxu0 0.0
        %1287 = vmatprep.subr.mxu0 0.0
        %1288 = vmatpush2.msra.mxu0 0.0
        %1289 = vmatprep.subr.mxu0 0.0
        %1290 = vmatpush2.msra.mxu0 0.0
        %1291 = vmatprep.subr.mxu0 0.0
        %1292 = vmatpush2.msra.mxu0 0.0
        %1293 = vmatprep.subr.mxu0 0.0
        %1294 = vmatpush2.msra.mxu0 0.0
        %1295 = vmatprep.subr.mxu0 0.0
        %1296 = vmatpush2.msra.mxu0 0.0
        %1297 = vmatprep.subr.mxu0 0.0
        %1298 = vmatpush2.msra.mxu0 0.0
        %1299 = vmatprep.subr.mxu0 0.0
        %1300 = vmatpush2.msra.mxu0 0.0
        %1301 = vmatprep.subr.mxu0 0.0
        %1302 = vmatpush2.msra.mxu0 0.0
        %1303 = vmatprep.subr.mxu0 0.0
        %1304 = vmatpush2.msra.mxu0 0.0
        %1305 = vmatprep.subr.mxu0 0.0
        %1306 = vmatpush2.msra.mxu0 0.0
        %1307 = vmatprep.mubr.f32.mxu0 0.0
        %1308 = vmatmul.mubr.f32.gmra.mxu0 %v1107
        %v1309 = vpop.f32.mrf.mxu0
        %v1310 = vadd.f32 0.0, %v1309
        %v1311 = vpop.f32.mrf.mxu0
        %v1312 = vadd.f32 0.0, %v1311
        %1313 = vdwg.mxu0
        %v1314 = vadd.f32 %v1103, %v1239
        %v1315 = vadd.f32 %v1104, %v1241
        %v1316 = vadd.f32 %v1105, %v1310
        %v1317 = vadd.f32 %v1106, %v1312
        %v1318 = vxor.u32 %v1314, 2147483648
        %v1319 = vmul.f32 %v1318, 1.442695
        %v1320 = vpow.pop %v1319
        %v1321 = vadd.f32 %v1320, 1.0
        %v1322 = vrcp.pop %v1321
        %v1323 = vmul.f32 1.0, %v1322
        %v1324 = vxor.u32 %v1315, 2147483648
        %v1325 = vmul.f32 %v1324, 1.442695
        %v1326 = vpow.pop %v1325
        %v1327 = vadd.f32 %v1326, 1.0
        %v1328 = vrcp.pop %v1327
        %v1329 = vmul.f32 1.0, %v1328
        %v1330 = vtanh.pop %v1316
        %v1331 = vxor.u32 %v1317, 2147483648
        %v1332 = vmul.f32 %v1331, 1.442695
        %v1333 = vpow.pop %v1332
        %v1334 = vadd.f32 %v1333, 1.0
        %v1335 = vrcp.pop %v1334
        %v1336 = vmul.f32 1.0, %v1335
        %v1337 = vld [vmem:[#allocation4] sm:$0xff]
        %v1338 = vmul.f32 %v1329, %v1337
        %v1339 = vmul.f32 %v1323, %v1330
        %v1340 = vadd.f32 %v1338, %v1339
        %v1341 = vtanh.pop %v1340
        %v1342 = vmul.f32 %v1336, %v1341
        %s1343 = scalar_select %p1096, 1, 0
        %v1344 = vstv %s1343
        %vm1345 = vcmp.eq.s32.totalorder %v1344, 1
        %v1346 = vsel %vm1345, %v1340, %v1337
        %v1347 = vsel %vm1345, %v1342, %v1107
        %1348 = vst [vmem:[#allocation4] sm:$0xff] %v1346
        %1349 = vst [vmem:[#allocation3] sm:$0xff] %v1347
        %s1350 = scalar_lea.vmem %s291, %s1097 [#allocation8]
        %1351 = vst [vmem:[%s1350] sm:$0xff] %v1347
        %s1352 = smul.u32 %s323, 3
        %s1353 = sadd.s32 %s576, %s1352
        %p1354 = scmp.lt.s32.totalorder %s1353, 8
        %s1355 = smul.u32 %s323, 24
        %s1356 = sshra.s32 %s1355, 3
        %s1357 = sand.u32 %s1355, 7
        %s1358 = smul.u32 %s1356, 4
        %s1359 = smul.addr %s1358, 8
        %s1360 = scalar_lea.vmem [#allocation2], %s1359
        %v1361 = vld [vmem:[%s1360] sm:$0xff]
        %v1362 = vld [vmem:[%s1360 + $0x8] sm:$0xff]
        %v1363 = vld [vmem:[%s1360 + $0x10] sm:$0xff]
        %v1364 = vld [vmem:[%s1360 + $0x18] sm:$0xff]
        %v1365 = vld [vmem:[#allocation3] sm:$0xff]
        %v1366 = vld [vmem:[#allocation5] sm:$0xff]
        %v1367 = vld [vmem:[#allocation5 + $0x8] sm:$0xff]
        %v1368 = vld [vmem:[#allocation5 + $0x10] sm:$0xff]
        %v1369 = vld [vmem:[#allocation5 + $0x18] sm:$0xff]
        %v1370 = vld [vmem:[#allocation5 + $0x20] sm:$0xff]
        %v1371 = vld [vmem:[#allocation5 + $0x28] sm:$0xff]
        %v1372 = vld [vmem:[#allocation5 + $0x30] sm:$0xff]
        %v1373 = vld [vmem:[#allocation5 + $0x38] sm:$0xff]
        %v1374 = vld [vmem:[#allocation5 + $0x40] sm:$0xff]
        %v1375 = vld [vmem:[#allocation5 + $0x48] sm:$0xff]
        %v1376 = vld [vmem:[#allocation5 + $0x50] sm:$0xff]
        %v1377 = vld [vmem:[#allocation5 + $0x58] sm:$0xff]
        %v1378 = vld [vmem:[#allocation5 + $0x60] sm:$0xff]
        %v1379 = vld [vmem:[#allocation5 + $0x68] sm:$0xff]
        %v1380 = vld [vmem:[#allocation5 + $0x70] sm:$0xff]
        %v1381 = vld [vmem:[#allocation5 + $0x78] sm:$0xff]
        %v1382 = vld [vmem:[#allocation5 + $0x80] sm:$0xff]
        %v1383 = vld [vmem:[#allocation5 + $0x88] sm:$0xff]
        %v1384 = vld [vmem:[#allocation5 + $0x90] sm:$0xff]
        %v1385 = vld [vmem:[#allocation5 + $0x98] sm:$0xff]
        %v1386 = vld [vmem:[#allocation5 + $0xa0] sm:$0xff]
        %v1387 = vld [vmem:[#allocation5 + $0xa8] sm:$0xff]
        %v1388 = vld [vmem:[#allocation5 + $0xb0] sm:$0xff]
        %v1389 = vld [vmem:[#allocation5 + $0xb8] sm:$0xff]
        %v1390 = vld [vmem:[#allocation5 + $0xc0] sm:$0xff]
        %v1391 = vld [vmem:[#allocation5 + $0xc8] sm:$0xff]
        %v1392 = vld [vmem:[#allocation5 + $0xd0] sm:$0xff]
        %v1393 = vld [vmem:[#allocation5 + $0xd8] sm:$0xff]
        %v1394 = vld [vmem:[#allocation5 + $0xe0] sm:$0xff]
        %v1395 = vld [vmem:[#allocation5 + $0xe8] sm:$0xff]
        %v1396 = vld [vmem:[#allocation5 + $0xf0] sm:$0xff]
        %v1397 = vld [vmem:[#allocation5 + $0xf8] sm:$0xff]
        %v1398 = vld [vmem:[#allocation5 + $0x100] sm:$0xff]
        %v1399 = vld [vmem:[#allocation5 + $0x108] sm:$0xff]
        %v1400 = vld [vmem:[#allocation5 + $0x110] sm:$0xff]
        %v1401 = vld [vmem:[#allocation5 + $0x118] sm:$0xff]
        %v1402 = vld [vmem:[#allocation5 + $0x120] sm:$0xff]
        %v1403 = vld [vmem:[#allocation5 + $0x128] sm:$0xff]
        %v1404 = vld [vmem:[#allocation5 + $0x130] sm:$0xff]
        %v1405 = vld [vmem:[#allocation5 + $0x138] sm:$0xff]
        %v1406 = vld [vmem:[#allocation5 + $0x140] sm:$0xff]
        %v1407 = vld [vmem:[#allocation5 + $0x148] sm:$0xff]
        %v1408 = vld [vmem:[#allocation5 + $0x150] sm:$0xff]
        %v1409 = vld [vmem:[#allocation5 + $0x158] sm:$0xff]
        %v1410 = vld [vmem:[#allocation5 + $0x160] sm:$0xff]
        %v1411 = vld [vmem:[#allocation5 + $0x168] sm:$0xff]
        %v1412 = vld [vmem:[#allocation5 + $0x170] sm:$0xff]
        %v1413 = vld [vmem:[#allocation5 + $0x178] sm:$0xff]
        %v1414 = vld [vmem:[#allocation5 + $0x180] sm:$0xff]
        %v1415 = vld [vmem:[#allocation5 + $0x188] sm:$0xff]
        %v1416 = vld [vmem:[#allocation5 + $0x190] sm:$0xff]
        %v1417 = vld [vmem:[#allocation5 + $0x198] sm:$0xff]
        %v1418 = vld [vmem:[#allocation5 + $0x1a0] sm:$0xff]
        %v1419 = vld [vmem:[#allocation5 + $0x1a8] sm:$0xff]
        %v1420 = vld [vmem:[#allocation5 + $0x1b0] sm:$0xff]
        %v1421 = vld [vmem:[#allocation5 + $0x1b8] sm:$0xff]
        %v1422 = vld [vmem:[#allocation5 + $0x1c0] sm:$0xff]
        %v1423 = vld [vmem:[#allocation5 + $0x1c8] sm:$0xff]
        %v1424 = vld [vmem:[#allocation5 + $0x1d0] sm:$0xff]
        %v1425 = vld [vmem:[#allocation5 + $0x1d8] sm:$0xff]
        %v1426 = vld [vmem:[#allocation5 + $0x1e0] sm:$0xff]
        %v1427 = vld [vmem:[#allocation5 + $0x1e8] sm:$0xff]
        %v1428 = vld [vmem:[#allocation5 + $0x1f0] sm:$0xff]
        %v1429 = vld [vmem:[#allocation5 + $0x1f8] sm:$0xff]
        %1430 = vmatprep.subr.mxu0 %v1427
        %1431 = vmatpush1.msra.mxu0 %v1426
        %1432 = vmatprep.subr.mxu0 %v1423
        %1433 = vmatpush1.msra.mxu0 %v1422
        %1434 = vmatprep.subr.mxu0 %v1419
        %1435 = vmatpush1.msra.mxu0 %v1418
        %1436 = vmatprep.subr.mxu0 %v1415
        %1437 = vmatpush1.msra.mxu0 %v1414
        %1438 = vmatprep.subr.mxu0 %v1411
        %1439 = vmatpush1.msra.mxu0 %v1410
        %1440 = vmatprep.subr.mxu0 %v1407
        %1441 = vmatpush1.msra.mxu0 %v1406
        %1442 = vmatprep.subr.mxu0 %v1403
        %1443 = vmatpush1.msra.mxu0 %v1402
        %1444 = vmatprep.subr.mxu0 %v1399
        %1445 = vmatpush1.msra.mxu0 %v1398
        %1446 = vmatprep.subr.mxu0 %v1395
        %1447 = vmatpush1.msra.mxu0 %v1394
        %1448 = vmatprep.subr.mxu0 %v1391
        %1449 = vmatpush1.msra.mxu0 %v1390
        %1450 = vmatprep.subr.mxu0 %v1387
        %1451 = vmatpush1.msra.mxu0 %v1386
        %1452 = vmatprep.subr.mxu0 %v1383
        %1453 = vmatpush1.msra.mxu0 %v1382
        %1454 = vmatprep.subr.mxu0 %v1379
        %1455 = vmatpush1.msra.mxu0 %v1378
        %1456 = vmatprep.subr.mxu0 %v1375
        %1457 = vmatpush1.msra.mxu0 %v1374
        %1458 = vmatprep.subr.mxu0 %v1371
        %1459 = vmatpush1.msra.mxu0 %v1370
        %1460 = vmatprep.subr.mxu0 %v1367
        %1461 = vmatpush1.msra.mxu0 %v1366
        %1462 = vmatprep.subr.mxu0 0.0
        %1463 = vmatpush2.msra.mxu0 0.0
        %1464 = vmatprep.subr.mxu0 0.0
        %1465 = vmatpush2.msra.mxu0 0.0
        %1466 = vmatprep.subr.mxu0 0.0
        %1467 = vmatpush2.msra.mxu0 0.0
        %1468 = vmatprep.subr.mxu0 0.0
        %1469 = vmatpush2.msra.mxu0 0.0
        %1470 = vmatprep.subr.mxu0 0.0
        %1471 = vmatpush2.msra.mxu0 0.0
        %1472 = vmatprep.subr.mxu0 0.0
        %1473 = vmatpush2.msra.mxu0 0.0
        %1474 = vmatprep.subr.mxu0 0.0
        %1475 = vmatpush2.msra.mxu0 0.0
        %1476 = vmatprep.subr.mxu0 0.0
        %1477 = vmatpush2.msra.mxu0 0.0
        %1478 = vmatprep.subr.mxu0 0.0
        %1479 = vmatpush2.msra.mxu0 0.0
        %1480 = vmatprep.subr.mxu0 0.0
        %1481 = vmatpush2.msra.mxu0 0.0
        %1482 = vmatprep.subr.mxu0 0.0
        %1483 = vmatpush2.msra.mxu0 0.0
        %1484 = vmatprep.subr.mxu0 0.0
        %1485 = vmatpush2.msra.mxu0 0.0
        %1486 = vmatprep.subr.mxu0 0.0
        %1487 = vmatpush2.msra.mxu0 0.0
        %1488 = vmatprep.subr.mxu0 0.0
        %1489 = vmatpush2.msra.mxu0 0.0
        %1490 = vmatprep.subr.mxu0 0.0
        %1491 = vmatpush2.msra.mxu0 0.0
        %1492 = vmatprep.subr.mxu0 0.0
        %1493 = vmatpush2.msra.mxu0 0.0
        %1494 = vmatprep.mubr.f32.mxu0 0.0
        %1495 = vmatmul.mubr.f32.gmra.mxu0 %v1365
        %v1496 = vpop.f32.mrf.mxu0
        %v1497 = vadd.f32 0.0, %v1496
        %v1498 = vpop.f32.mrf.mxu0
        %v1499 = vadd.f32 0.0, %v1498
        %1500 = vdwg.mxu0
        %1501 = vmatprep.subr.mxu0 %v1429
        %1502 = vmatpush1.msra.mxu0 %v1428
        %1503 = vmatprep.subr.mxu0 %v1425
        %1504 = vmatpush1.msra.mxu0 %v1424
        %1505 = vmatprep.subr.mxu0 %v1421
        %1506 = vmatpush1.msra.mxu0 %v1420
        %1507 = vmatprep.subr.mxu0 %v1417
        %1508 = vmatpush1.msra.mxu0 %v1416
        %1509 = vmatprep.subr.mxu0 %v1413
        %1510 = vmatpush1.msra.mxu0 %v1412
        %1511 = vmatprep.subr.mxu0 %v1409
        %1512 = vmatpush1.msra.mxu0 %v1408
        %1513 = vmatprep.subr.mxu0 %v1405
        %1514 = vmatpush1.msra.mxu0 %v1404
        %1515 = vmatprep.subr.mxu0 %v1401
        %1516 = vmatpush1.msra.mxu0 %v1400
        %1517 = vmatprep.subr.mxu0 %v1397
        %1518 = vmatpush1.msra.mxu0 %v1396
        %1519 = vmatprep.subr.mxu0 %v1393
        %1520 = vmatpush1.msra.mxu0 %v1392
        %1521 = vmatprep.subr.mxu0 %v1389
        %1522 = vmatpush1.msra.mxu0 %v1388
        %1523 = vmatprep.subr.mxu0 %v1385
        %1524 = vmatpush1.msra.mxu0 %v1384
        %1525 = vmatprep.subr.mxu0 %v1381
        %1526 = vmatpush1.msra.mxu0 %v1380
        %1527 = vmatprep.subr.mxu0 %v1377
        %1528 = vmatpush1.msra.mxu0 %v1376
        %1529 = vmatprep.subr.mxu0 %v1373
        %1530 = vmatpush1.msra.mxu0 %v1372
        %1531 = vmatprep.subr.mxu0 %v1369
        %1532 = vmatpush1.msra.mxu0 %v1368
        %1533 = vmatprep.subr.mxu0 0.0
        %1534 = vmatpush2.msra.mxu0 0.0
        %1535 = vmatprep.subr.mxu0 0.0
        %1536 = vmatpush2.msra.mxu0 0.0
        %1537 = vmatprep.subr.mxu0 0.0
        %1538 = vmatpush2.msra.mxu0 0.0
        %1539 = vmatprep.subr.mxu0 0.0
        %1540 = vmatpush2.msra.mxu0 0.0
        %1541 = vmatprep.subr.mxu0 0.0
        %1542 = vmatpush2.msra.mxu0 0.0
        %1543 = vmatprep.subr.mxu0 0.0
        %1544 = vmatpush2.msra.mxu0 0.0
        %1545 = vmatprep.subr.mxu0 0.0
        %1546 = vmatpush2.msra.mxu0 0.0
        %1547 = vmatprep.subr.mxu0 0.0
        %1548 = vmatpush2.msra.mxu0 0.0
        %1549 = vmatprep.subr.mxu0 0.0
        %1550 = vmatpush2.msra.mxu0 0.0
        %1551 = vmatprep.subr.mxu0 0.0
        %1552 = vmatpush2.msra.mxu0 0.0
        %1553 = vmatprep.subr.mxu0 0.0
        %1554 = vmatpush2.msra.mxu0 0.0
        %1555 = vmatprep.subr.mxu0 0.0
        %1556 = vmatpush2.msra.mxu0 0.0
        %1557 = vmatprep.subr.mxu0 0.0
        %1558 = vmatpush2.msra.mxu0 0.0
        %1559 = vmatprep.subr.mxu0 0.0
        %1560 = vmatpush2.msra.mxu0 0.0
        %1561 = vmatprep.subr.mxu0 0.0
        %1562 = vmatpush2.msra.mxu0 0.0
        %1563 = vmatprep.subr.mxu0 0.0
        %1564 = vmatpush2.msra.mxu0 0.0
        %1565 = vmatprep.mubr.f32.mxu0 0.0
        %1566 = vmatmul.mubr.f32.gmra.mxu0 %v1365
        %v1567 = vpop.f32.mrf.mxu0
        %v1568 = vadd.f32 0.0, %v1567
        %v1569 = vpop.f32.mrf.mxu0
        %v1570 = vadd.f32 0.0, %v1569
        %1571 = vdwg.mxu0
        %v1572 = vadd.f32 %v1361, %v1497
        %v1573 = vadd.f32 %v1362, %v1499
        %v1574 = vadd.f32 %v1363, %v1568
        %v1575 = vadd.f32 %v1364, %v1570
        %v1576 = vxor.u32 %v1572, 2147483648
        %v1577 = vmul.f32 %v1576, 1.442695
        %v1578 = vpow.pop %v1577
        %v1579 = vadd.f32 %v1578, 1.0
        %v1580 = vrcp.pop %v1579
        %v1581 = vmul.f32 1.0, %v1580
        %v1582 = vxor.u32 %v1573, 2147483648
        %v1583 = vmul.f32 %v1582, 1.442695
        %v1584 = vpow.pop %v1583
        %v1585 = vadd.f32 %v1584, 1.0
        %v1586 = vrcp.pop %v1585
        %v1587 = vmul.f32 1.0, %v1586
        %v1588 = vtanh.pop %v1574
        %v1589 = vxor.u32 %v1575, 2147483648
        %v1590 = vmul.f32 %v1589, 1.442695
        %v1591 = vpow.pop %v1590
        %v1592 = vadd.f32 %v1591, 1.0
        %v1593 = vrcp.pop %v1592
        %v1594 = vmul.f32 1.0, %v1593
        %v1595 = vld [vmem:[#allocation4] sm:$0xff]
        %v1596 = vmul.f32 %v1587, %v1595
        %v1597 = vmul.f32 %v1581, %v1588
        %v1598 = vadd.f32 %v1596, %v1597
        %v1599 = vtanh.pop %v1598
        %v1600 = vmul.f32 %v1594, %v1599
        %s1601 = scalar_select %p1354, 1, 0
        %v1602 = vstv %s1601
        %vm1603 = vcmp.eq.s32.totalorder %v1602, 1
        %v1604 = vsel %vm1603, %v1598, %v1595
        %v1605 = vsel %vm1603, %v1600, %v1365
        %1606 = vst [vmem:[#allocation4] sm:$0xff] %v1604
        %1607 = vst [vmem:[#allocation3] sm:$0xff] %v1605
        %s1608 = scalar_lea.vmem %s291, %s1355 [#allocation8]
        %1609 = vst [vmem:[%s1608] sm:$0xff] %v1605
        %s1610 = sand.u32 %s165, 1
        %s1611 = scalar_lea.sflag [#allocation7], %s1610
        %s1612 = sand.u32 %s165, 1
        %s1613 = smul.addr %s1612, 32
        %s1614 = scalar_lea.vmem [#allocation8], %s1613
        // Predicated region
        $region45: #{tpu_custom_call.1} parent=35 // pred_check
          %p1615 = pneg %p175
        $region46: #{tpu_custom_call.1} parent=35 // pred_check_branch
          %1617 = sbr.rel (%p1615) target = $region48
        $region47: #{tpu_custom_call.1} parent=35 // pred_region
          %s1618 = ssub.s32 1, %s23
          %s1619 = smul.u32 %s1618, %s24
          %s1620 = ssub.s32 1, %s24
          %s1621 = smul.u32 %s23, %s1620
          %s1622 = sadd.s32 %s1619, %s1621
          %s1623 = smul.u32 4, %s1622
          %s1625 = ssub.s32 512, 512
          %1626 = vsyncadd %s1611, %s1625
          %s1627 = smul.addr %s23, 8
          %s1628 = sadd.s32 %s1623, %s1627
          %s1629 = smul.addr %s1628, 128
          %s1630 = scalar_lea.hbm %s4, %s1629
          %s1631 = sshll.u32 %s1614, 4
          %s1632 = int_to_ptr.vmem [resolvable:$true] %s1631
          %1637 = dma.vmem_to_hbm [thread:$0]  %s1632, 512, %s1630, %s1611, 128, 128, 8
        $region48: #{tpu_custom_call.1} parent=35 // pred_fallthru
          _
      $region36: #{tpu_custom_call.1} parent=5 // pred_fallthru
        _
      %p1638 = scmp.le.s32.totalorder 2, %s14
      // Predicated region
      $region49: #{tpu_custom_call.1} parent=5 // pred_check
        %p1639 = pneg %p1638
      $region50: #{tpu_custom_call.1} parent=5 // pred_check_branch
        %1641 = sbr.rel (%p1639) target = $region52
      $region51: #{tpu_custom_call.1} parent=5 // pred_region
        %s1642 = ssub.s32 %s14, 2
        // Predicated region
        $region53: #{tpu_custom_call.1} parent=51 // pred_check
          %p1643 = pneg %p181
        $region54: #{tpu_custom_call.1} parent=51 // pred_check_branch
          %1645 = sbr.rel (%p1643) target = $region56
        $region55: #{tpu_custom_call.1} parent=51 // pred_region
          %s1646 = sand.u32 %s166, 1
          %s1647 = scalar_lea.sflag [#allocation7], %s1646
          %s1648 = sand.u32 %s166, 1
          %s1649 = smul.addr %s1648, 32
          %s1650 = scalar_lea.vmem [#allocation8], %s1649
          %1651 = dma.done %s1647, 512
        $region56: #{tpu_custom_call.1} parent=51 // pred_fallthru
          _
      $region52: #{tpu_custom_call.1} parent=5 // pred_fallthru
        _
    $region6: #{tpu_custom_call.1} parent=1 // loop_footer
      %s18 = sadd.s32 1, %s14
    $region7: #{tpu_custom_call.1} parent=1 // loop_footer_branch
      %13 = sbr.rel target = $region3
    $region8: #{tpu_custom_call.1} parent=1 // loop_exit
      _
    %1652 = vsyncpa [#allocation6], 1
    %s1653 = scalar_lea.sflag [#allocation6], 1
    %1654 = vsyncpa %s1653, 1
    %1655 = vsyncpa [#allocation7], 1
    %s1656 = scalar_lea.sflag [#allocation7], 1
    %1657 = vsyncpa %s1656, 1

</llo_original>
